<compile_context>
chip_gen: v6e
topology: v6e:2x2x1
jax: 0.10.0
libtpu: 0.0.40
codegen_flags: <defaults>
</compile_context>

<pallas_src>
import jax
import jax.numpy as jnp
import numpy as np
from jax import lax
from jax.experimental import pallas as pl
from jax.experimental.pallas import tpu as pltpu


# ----------------------------------------------------------------------------
# Weight packing (pure JAX, done once per call outside the kernel)
# ----------------------------------------------------------------------------
def _pooled_conv_mats(w_hwio, out_w, in_w, pad):
    """Pack HWIO conv weights into per-kernel-row matmul operands M[ki].

    Activation layout: input lane = jj * Cin + c   (jj in [0, in_w)),
    output lane       = je * (out_w//2 * Cout) + j2 * Cout + co,
    where the conv output column is j = 2*j2 + je (je = column parity; the
    2x2 pool along W becomes a max over the two 64-lane halves).  Spatial W
    zero-padding is folded in by masking invalid taps.
    Returns M of shape [kh, in_w*Cin, out_w*Cout].
    """
    kh, kw, cin, cout = w_hwio.shape
    half = out_w // 2
    shape = (kh, kw, 2, half, cin, cout)
    ki = jnp.arange(kh).reshape(kh, 1, 1, 1, 1, 1)
    kj = jnp.arange(kw).reshape(1, kw, 1, 1, 1, 1)
    je = jnp.arange(2).reshape(1, 1, 2, 1, 1, 1)
    j2 = jnp.arange(half).reshape(1, 1, 1, half, 1, 1)
    c = jnp.arange(cin).reshape(1, 1, 1, 1, cin, 1)
    co = jnp.arange(cout).reshape(1, 1, 1, 1, 1, cout)

    jj = 2 * j2 + je + kj - pad
    valid = (jj >= 0) & (jj < in_w)
    in_lane = jnp.clip(jj, 0, in_w - 1) * cin + c
    out_lane = je * (half * cout) + j2 * cout + co

    vals = jnp.broadcast_to(w_hwio[:, :, None, None, :, :], shape)
    vals = vals * valid.astype(w_hwio.dtype)

    m = jnp.zeros((kh, in_w * cin, out_w * cout), w_hwio.dtype)
    m = m.at[jnp.broadcast_to(ki, shape),
             jnp.broadcast_to(in_lane, shape),
             jnp.broadcast_to(out_lane, shape)].add(vals)
    return m


def _pack_params(params, dtype):
    w1, b1 = params["w1"], params["b1"]   # 3x3, 4->8,  pad 1
    w2, b2 = params["w2"], params["b2"]   # 3x3, 8->16, pad 1
    w3, b3 = params["w3"], params["b3"]   # 4x4, 16->32, valid
    wc, bc = params["wc"], params["bc"]   # 32 -> 10

    # conv1 input is pre-padded along W in the wrapper (18 cols), so pad=0.
    m1 = _pooled_conv_mats(w1, out_w=16, in_w=18, pad=0)           # [3, 72, 128]
    m2 = _pooled_conv_mats(w2, out_w=8, in_w=8, pad=1)             # [3, 64, 128]
    m3 = w3.reshape(4, 4 * 16, 32)                                 # [4, 64, 32]

    b1h = jnp.tile(b1, 16)[None, :]                                # [1, 128]
    b2h = jnp.tile(b2, 8)[None, :]                                 # [1, 128]
    b3r = b3[None, :]                                              # [1, 32]

    wc_pad = jnp.zeros((32, 128), jnp.float32).at[:, :10].set(wc)  # lane-dense
    bc_pad = jnp.zeros((1, 128), jnp.float32).at[0, :10].set(bc)
    return (m1.astype(dtype), b1h, m2.astype(dtype), b2h,
            m3.astype(dtype), b3r, wc_pad.astype(dtype), bc_pad)


# ----------------------------------------------------------------------------
# Fused Pallas kernel: TB images per grid step, everything stays in VMEM.
# Activation row index inside a block = spatial_row * TB + image.
# ----------------------------------------------------------------------------
def _svhn_fused_kernel(x_ref, m1_ref, b1_ref, m2_ref, b2_ref, m3_ref, b3_ref,
                       wc_ref, bc_ref, o_ref, s1_ref, s2_ref, s3_ref):
    f32 = jnp.float32
    tb = o_ref.shape[0]             # images per grid step
    wdt = m1_ref.dtype              # matmul operand dtype (f32 or bf16)

    # One-time zero init of the conv2 H-padding row groups (groups 0 and 9 of
    # s2); scratch persists across grid steps and these rows are never
    # overwritten afterwards.
    @pl.when(pl.program_id(0) == 0)
    def _():
        zeros = jnp.zeros((tb, 64), f32)
        s2_ref[pl.ds(0, tb), :] = zeros
        s2_ref[pl.ds(9 * tb, tb), :] = zeros

    # ---- conv1 (3x3, pad pre-applied) : 3 dots with M = 16*TB -------------
    y1 = None
    for ki in range(3):
        lhs = x_ref[pl.ds(ki * tb, 16 * tb), :]                 # [16*TB, 72]
        t = jnp.dot(lhs, m1_ref[ki], preferred_element_type=f32)
        y1 = t if y1 is None else y1 + t
    s1_ref[...] = jnp.maximum(y1 + b1_ref[...], 0.0)            # [16*TB, 128]

    # ---- fused 2x2 maxpool #1 -> conv2 input (with H pad groups 0 and 9) --
    for j in range(8):
        a = s1_ref[pl.ds((2 * j) * tb, tb), :]
        b = s1_ref[pl.ds((2 * j + 1) * tb, tb), :]
        m = jnp.maximum(a, b)                                   # H pool
        m = jnp.maximum(m[:, :64], m[:, 64:])                   # W (parity) pool
        s2_ref[pl.ds((j + 1) * tb, tb), :] = m                  # [TB, 64]

    # ---- conv2 (3x3, pad=1) : 3 dots with M = 8*TB -------------------------
    y2 = None
    for ki in range(3):
        lhs = s2_ref[pl.ds(ki * tb, 8 * tb), :].astype(wdt)     # [8*TB, 64]
        t = jnp.dot(lhs, m2_ref[ki], preferred_element_type=f32)
        y2 = t if y2 is None else y2 + t
    s3_ref[...] = jnp.maximum(y2 + b2_ref[...], 0.0)            # [8*TB, 128]

    # ---- fused 2x2 maxpool #2 + conv3 (4x4 valid) : 4 dots with M = TB -----
    acc = None
    for j in range(4):
        a = s3_ref[pl.ds((2 * j) * tb, tb), :]
        b = s3_ref[pl.ds((2 * j + 1) * tb, tb), :]
        m = jnp.maximum(a, b)
        p = jnp.maximum(m[:, :64], m[:, 64:])                   # [TB, 64]
        t = jnp.dot(p.astype(wdt), m3_ref[j], preferred_element_type=f32)
        acc = t if acc is None else acc + t
    feat = jnp.maximum(acc + b3_ref[...], 0.0)                  # [TB, 32]

    # ---- classifier: lane-dense padded logits [TB, 128] --------------------
    o_ref[...] = (jnp.dot(feat.astype(wdt), wc_ref[...],
                          preferred_element_type=f32) + bc_ref[...])


# ----------------------------------------------------------------------------
# Forward
# ----------------------------------------------------------------------------
def _round_up(x, m):
    return (x + m - 1) // m * m


def svhn_forward(x_nchw, params, tb_max=64, compute_dtype=jnp.float32):
    """SVHN forward: NCHW input -> [N, 10] logits via one fused Pallas kernel.

    compute_dtype=jnp.bfloat16 switches the matmul operands to bf16 (f32
    accumulation) for extra MXU throughput on v6e/v7x.
    """
    n = x_nchw.shape[0]
    # Batch tile: multiple of 8 (sublane granule); large TB fills the MXU M
    # dimension; at least 2 grid steps lets megacore shard the batch axis.
    tb = int(min(tb_max, _round_up(n, 8)))
    n_pad = _round_up(n, tb)
    nblk = n_pad // tb

    # NCHW -> NHWC, pad batch, pad spatial by 1 for the 3x3/pad1 conv.
    x = jnp.transpose(x_nchw, (0, 2, 3, 1)).astype(jnp.float32)   # [N,16,16,4]
    if n_pad != n:
        x = jnp.pad(x, ((0, n_pad - n), (0, 0), (0, 0), (0, 0)))
    xp = jnp.pad(x, ((0, 0), (1, 1), (1, 1), (0, 0)))             # [n_pad,18,18,4]
    # Row-major per block: row = spatial_row * TB + image; lanes = W*C = 72.
    xp = xp.reshape(nblk, tb, 18, 72).transpose(0, 2, 1, 3)
    xp = xp.reshape(nblk * 18 * tb, 72).astype(compute_dtype)

    m1, b1h, m2, b2h, m3, b3r, wcp, bcp = _pack_params(params, compute_dtype)

    out = pl.pallas_call(
        _svhn_fused_kernel,
        out_shape=jax.ShapeDtypeStruct((n_pad, 128), jnp.float32),
        grid=(nblk,),
        in_specs=[
            pl.BlockSpec((18 * tb, 72), lambda i: (i, 0)),       # x block (row-major)
            pl.BlockSpec((3, 72, 128), lambda i: (0, 0, 0)),     # M1
            pl.BlockSpec((1, 128), lambda i: (0, 0)),            # b1
            pl.BlockSpec((3, 64, 128), lambda i: (0, 0, 0)),     # M2
            pl.BlockSpec((1, 128), lambda i: (0, 0)),            # b2
            pl.BlockSpec((4, 64, 32), lambda i: (0, 0, 0)),      # M3
            pl.BlockSpec((1, 32), lambda i: (0, 0)),             # b3
            pl.BlockSpec((32, 128), lambda i: (0, 0)),           # Wc (padded)
            pl.BlockSpec((1, 128), lambda i: (0, 0)),            # bc (padded)
        ],
        out_specs=pl.BlockSpec((tb, 128), lambda i: (i, 0)),
        scratch_shapes=[
            pltpu.VMEM((16 * tb, 128), jnp.float32),   # conv1 output slab
            pltpu.VMEM((10 * tb, 64), jnp.float32),    # conv2 input (H-padded)
            pltpu.VMEM((8 * tb, 128), jnp.float32),    # conv2 output slab
        ],
        compiler_params=pltpu.CompilerParams(
            dimension_semantics=("parallel",)),
    )(xp, m1, b1h, m2, b2h, m3, b3r, wcp, bcp)

    return out[:n, :10]                                           # [N, 10]


# ----------------------------------------------------------------------------
# Pure-JAX reference (for correctness check)
# ----------------------------------------------------------------------------
def svhn_reference(x_nchw, params):
    x = jnp.transpose(x_nchw, (0, 2, 3, 1)).astype(jnp.float32)

    def conv(x, w, b, pad):
        y = lax.conv_general_dilated(
            x, w, window_strides=(1, 1),
            padding=((pad, pad), (pad, pad)),
            dimension_numbers=("NHWC", "HWIO", "NHWC"))
        return jnp.maximum(y + b[None, None, None, :], 0.0)

    def pool(x):
        return lax.reduce_window(x, -jnp.inf, lax.max,
                                 (1, 2, 2, 1), (1, 2, 2, 1), "VALID")

    x = conv(x, params["w1"], params["b1"], 1)
    x = pool(x)
    x = conv(x, params["w2"], params["b2"], 1)
    x = pool(x)
    x = conv(x, params["w3"], params["b3"], 0)
    feat = x.reshape(x.shape[0], -1)
    return feat @ params["wc"] + params["bc"][None, :]


# ----------------------------------------------------------------------------
# Deterministic parameter init
# ----------------------------------------------------------------------------
def init_params(key):
    ks = jax.random.split(key, 8)
    return {
        # conv1: 4 -> 8, 3x3, pad 1        (HWIO)
        "w1": 0.1 * jax.random.normal(ks[0], (3, 3, 4, 8), jnp.float32),
        "b1": 0.05 * jax.random.normal(ks[1], (8,), jnp.float32),
        # conv2: 8 -> 16, 3x3, pad 1
        "w2": 0.1 * jax.random.normal(ks[2], (3, 3, 8, 16), jnp.float32),
        "b2": 0.05 * jax.random.normal(ks[3], (16,), jnp.float32),
        # conv3: 16 -> 32, 4x4, pad 0 (4x4 spatial -> 1x1  =>  n_channel = 32)
        "w3": 0.1 * jax.random.normal(ks[4], (4, 4, 16, 32), jnp.float32),
        "b3": 0.05 * jax.random.normal(ks[5], (32,), jnp.float32),
        # classifier: Linear(n_channel=32, num_classes=10)
        "wc": 0.1 * jax.random.normal(ks[6], (32, 10), jnp.float32),
        "bc": 0.05 * jax.random.normal(ks[7], (10,), jnp.float32),
    }


if __name__ == "__main__":
    key = jax.random.PRNGKey(0)
    pkey, xkey = jax.random.split(key)
    params = init_params(pkey)

    # small NCHW input (PyTorch convention): batch=2, channels=4, spatial=16
    x = jax.random.normal(xkey, (2, 4, 16, 16), jnp.float32)

    out = jax.block_until_ready(jax.jit(svhn_forward)(x, params))
    ref = jax.block_until_ready(svhn_reference(x, params))

    assert out.shape == (2, 10), out.shape
    np.testing.assert_allclose(np.asarray(out), np.asarray(ref),
                               rtol=1e-3, atol=1e-3)
    print("KERNEL_OK")
</pallas_src>

<mosaic_0001>
module attributes {stable_mosaic.version = 11 : i64} {
  func.func private @main(%arg0: i32) attributes {dimension_semantics = [#tpu.dimension_semantics<core_parallel>], iteration_bounds = array<i64: 2>, tpu.core_type = #tpu.core_type<sc_scalar_subcore>, window_params = []} {
    return
  }
}

module attributes {stable_mosaic.version = 11 : i64} {
  func.func private @main(%arg0: i32) attributes {dimension_semantics = [#tpu.dimension_semantics<core_parallel>], iteration_bounds = array<i64: 2>, tpu.core_type = #tpu.core_type<sc_scalar_subcore>, window_params = []} {
    return
  }
}

module attributes {stable_mosaic.version = 11 : i64} {
  func.func @_svhn_fused_kernel(%arg0: i32, %arg1: memref<144x72xf32, #tpu.memory_space<vmem>>, %arg2: memref<3x72x128xf32, #tpu.memory_space<vmem>>, %arg3: memref<1x128xf32, #tpu.memory_space<vmem>>, %arg4: memref<3x64x128xf32, #tpu.memory_space<vmem>>, %arg5: memref<1x128xf32, #tpu.memory_space<vmem>>, %arg6: memref<4x64x32xf32, #tpu.memory_space<vmem>>, %arg7: memref<1x32xf32, #tpu.memory_space<vmem>>, %arg8: memref<32x128xf32, #tpu.memory_space<vmem>>, %arg9: memref<1x128xf32, #tpu.memory_space<vmem>>, %arg10: memref<8x128xf32, #tpu.memory_space<vmem>>, %arg11: memref<128x128xf32, #tpu.memory_space<vmem>>, %arg12: memref<80x64xf32, #tpu.memory_space<vmem>>, %arg13: memref<64x128xf32, #tpu.memory_space<vmem>>) attributes {dimension_semantics = [#tpu.dimension_semantics<parallel>], iteration_bounds = array<i64: 1>, scalar_prefetch = 0 : i64, scratch_operands = 3 : i64, tpu.core_type = #tpu.core_type<tc>, window_params = [{transform_indices = @transform_0, window_bounds = array<i64: 144, 72>}, {pipeline_mode = #tpu.pipeline_mode<synchronous>, transform_indices = @transform_1, window_bounds = array<i64: 3, 72, 128>}, {pipeline_mode = #tpu.pipeline_mode<synchronous>, transform_indices = @transform_2, window_bounds = array<i64: 1, 128>}, {pipeline_mode = #tpu.pipeline_mode<synchronous>, transform_indices = @transform_3, window_bounds = array<i64: 3, 64, 128>}, {pipeline_mode = #tpu.pipeline_mode<synchronous>, transform_indices = @transform_4, window_bounds = array<i64: 1, 128>}, {pipeline_mode = #tpu.pipeline_mode<synchronous>, transform_indices = @transform_5, window_bounds = array<i64: 4, 64, 32>}, {pipeline_mode = #tpu.pipeline_mode<synchronous>, transform_indices = @transform_6, window_bounds = array<i64: 1, 32>}, {pipeline_mode = #tpu.pipeline_mode<synchronous>, transform_indices = @transform_7, window_bounds = array<i64: 32, 128>}, {pipeline_mode = #tpu.pipeline_mode<synchronous>, transform_indices = @transform_8, window_bounds = array<i64: 1, 128>}, {transform_indices = @transform_9, window_bounds = array<i64: 8, 128>}]} {
    %c0_i32 = arith.constant 0 : i32
    %0 = arith.cmpi eq, %arg0, %c0_i32 : i32
    %1 = arith.extui %0 : i1 to i32
    %c0_i32_0 = arith.constant 0 : i32
    %2 = arith.cmpi ne, %1, %c0_i32_0 : i32
    scf.if %2 {
      %cst_117 = arith.constant 0.000000e+00 : f32
      %149 = vector.broadcast %cst_117 : f32 to vector<8x64xf32>
      %c0_118 = arith.constant 0 : index
      %c0_119 = arith.constant 0 : index
      %150 = vector.load %arg12[%c0_118, %c0_119] : memref<80x64xf32, #tpu.memory_space<vmem>>, vector<8x64xf32>
      tpu.vector_store %arg12[%c0_118, %c0_119], %149 {strides = array<i32>} : memref<80x64xf32, #tpu.memory_space<vmem>>, vector<8x64xf32>,
      %c72_120 = arith.constant 72 : index
      %c0_121 = arith.constant 0 : index
      %151 = vector.load %arg12[%c72_120, %c0_121] : memref<80x64xf32, #tpu.memory_space<vmem>>, vector<8x64xf32>
      tpu.vector_store %arg12[%c72_120, %c0_121], %149 {strides = array<i32>} : memref<80x64xf32, #tpu.memory_space<vmem>>, vector<8x64xf32>,
    } else {
    }
    %c0 = arith.constant 0 : index
    %c0_1 = arith.constant 0 : index
    %3 = vector.load %arg1[%c0, %c0_1] : memref<144x72xf32, #tpu.memory_space<vmem>>, vector<128x72xf32>
    %c0_2 = arith.constant 0 : index
    %c0_3 = arith.constant 0 : index
    %c0_4 = arith.constant 0 : index
    %4 = vector.load %arg2[%c0_2, %c0_3, %c0_4] : memref<3x72x128xf32, #tpu.memory_space<vmem>>, vector<1x72x128xf32>
    %5 = vector.shape_cast %4 : vector<1x72x128xf32> to vector<72x128xf32>
    %cst = arith.constant dense<0.000000e+00> : vector<128x128xf32>
    %6 = tpu.matmul %3, %5, %cst {dimension_numbers = #tpu.dot_dimension_numbers<[1], [0], [0], [1], [0, 0, 1, 1], [], []>} : vector<128x72xf32>, vector<72x128xf32>, vector<128x128xf32> -> vector<128x128xf32>
    %c8 = arith.constant 8 : index
    %c0_5 = arith.constant 0 : index
    %7 = vector.load %arg1[%c8, %c0_5] : memref<144x72xf32, #tpu.memory_space<vmem>>, vector<128x72xf32>
    %c1 = arith.constant 1 : index
    %c0_6 = arith.constant 0 : index
    %c0_7 = arith.constant 0 : index
    %8 = vector.load %arg2[%c1, %c0_6, %c0_7] : memref<3x72x128xf32, #tpu.memory_space<vmem>>, vector<1x72x128xf32>
    %9 = vector.shape_cast %8 : vector<1x72x128xf32> to vector<72x128xf32>
    %cst_8 = arith.constant dense<0.000000e+00> : vector<128x128xf32>
    %10 = tpu.matmul %7, %9, %cst_8 {dimension_numbers = #tpu.dot_dimension_numbers<[1], [0], [0], [1], [0, 0, 1, 1], [], []>} : vector<128x72xf32>, vector<72x128xf32>, vector<128x128xf32> -> vector<128x128xf32>
    %11 = arith.addf %6, %10 : vector<128x128xf32>
    %c16 = arith.constant 16 : index
    %c0_9 = arith.constant 0 : index
    %12 = vector.load %arg1[%c16, %c0_9] : memref<144x72xf32, #tpu.memory_space<vmem>>, vector<128x72xf32>
    %c2 = arith.constant 2 : index
    %c0_10 = arith.constant 0 : index
    %c0_11 = arith.constant 0 : index
    %13 = vector.load %arg2[%c2, %c0_10, %c0_11] : memref<3x72x128xf32, #tpu.memory_space<vmem>>, vector<1x72x128xf32>
    %14 = vector.shape_cast %13 : vector<1x72x128xf32> to vector<72x128xf32>
    %cst_12 = arith.constant dense<0.000000e+00> : vector<128x128xf32>
    %15 = tpu.matmul %12, %14, %cst_12 {dimension_numbers = #tpu.dot_dimension_numbers<[1], [0], [0], [1], [0, 0, 1, 1], [], []>} : vector<128x72xf32>, vector<72x128xf32>, vector<128x128xf32> -> vector<128x128xf32>
    %16 = arith.addf %11, %15 : vector<128x128xf32>
    %c0_13 = arith.constant 0 : index
    %c0_14 = arith.constant 0 : index
    %17 = vector.load %arg3[%c0_13, %c0_14] : memref<1x128xf32, #tpu.memory_space<vmem>>, vector<1x128xf32>
    %18 = vector.broadcast %17 : vector<1x128xf32> to vector<128x128xf32>
    %19 = arith.addf %16, %18 : vector<128x128xf32>
    %cst_15 = arith.constant 0.000000e+00 : f32
    %20 = vector.broadcast %cst_15 : f32 to vector<128x128xf32>
    %21 = arith.maximumf %19, %20 : vector<128x128xf32>
    %c0_16 = arith.constant 0 : index
    %c0_17 = arith.constant 0 : index
    %22 = vector.load %arg11[%c0_16, %c0_17] : memref<128x128xf32, #tpu.memory_space<vmem>>, vector<128x128xf32>
    tpu.vector_store %arg11[%c0_16, %c0_17], %21 {strides = array<i32>} : memref<128x128xf32, #tpu.memory_space<vmem>>, vector<128x128xf32>,
    %c0_18 = arith.constant 0 : index
    %c0_19 = arith.constant 0 : index
    %23 = vector.load %arg11[%c0_18, %c0_19] : memref<128x128xf32, #tpu.memory_space<vmem>>, vector<8x128xf32>
    %c8_20 = arith.constant 8 : index
    %c0_21 = arith.constant 0 : index
    %24 = vector.load %arg11[%c8_20, %c0_21] : memref<128x128xf32, #tpu.memory_space<vmem>>, vector<8x128xf32>
    %25 = arith.maximumf %23, %24 : vector<8x128xf32>
    %26 = vector.extract_strided_slice %25 {offsets = [0, 0], sizes = [8, 64], strides = [1, 1]} : vector<8x128xf32> to vector<8x64xf32>
    %27 = vector.extract_strided_slice %25 {offsets = [0, 64], sizes = [8, 64], strides = [1, 1]} : vector<8x128xf32> to vector<8x64xf32>
    %28 = arith.maximumf %26, %27 : vector<8x64xf32>
    %c8_22 = arith.constant 8 : index
    %c0_23 = arith.constant 0 : index
    %29 = vector.load %arg12[%c8_22, %c0_23] : memref<80x64xf32, #tpu.memory_space<vmem>>, vector<8x64xf32>
    tpu.vector_store %arg12[%c8_22, %c0_23], %28 {strides = array<i32>} : memref<80x64xf32, #tpu.memory_space<vmem>>, vector<8x64xf32>,
    %c16_24 = arith.constant 16 : index
    %c0_25 = arith.constant 0 : index
    %30 = vector.load %arg11[%c16_24, %c0_25] : memref<128x128xf32, #tpu.memory_space<vmem>>, vector<8x128xf32>
    %c24 = arith.constant 24 : index
    %c0_26 = arith.constant 0 : index
    %31 = vector.load %arg11[%c24, %c0_26] : memref<128x128xf32, #tpu.memory_space<vmem>>, vector<8x128xf32>
    %32 = arith.maximumf %30, %31 : vector<8x128xf32>
    %33 = vector.extract_strided_slice %32 {offsets = [0, 0], sizes = [8, 64], strides = [1, 1]} : vector<8x128xf32> to vector<8x64xf32>
    %34 = vector.extract_strided_slice %32 {offsets = [0, 64], sizes = [8, 64], strides = [1, 1]} : vector<8x128xf32> to vector<8x64xf32>
    %35 = arith.maximumf %33, %34 : vector<8x64xf32>
    %c16_27 = arith.constant 16 : index
    %c0_28 = arith.constant 0 : index
    %36 = vector.load %arg12[%c16_27, %c0_28] : memref<80x64xf32, #tpu.memory_space<vmem>>, vector<8x64xf32>
    tpu.vector_store %arg12[%c16_27, %c0_28], %35 {strides = array<i32>} : memref<80x64xf32, #tpu.memory_space<vmem>>, vector<8x64xf32>,
    %c32 = arith.constant 32 : index
    %c0_29 = arith.constant 0 : index
    %37 = vector.load %arg11[%c32, %c0_29] : memref<128x128xf32, #tpu.memory_space<vmem>>, vector<8x128xf32>
    %c40 = arith.constant 40 : index
    %c0_30 = arith.constant 0 : index
    %38 = vector.load %arg11[%c40, %c0_30] : memref<128x128xf32, #tpu.memory_space<vmem>>, vector<8x128xf32>
    %39 = arith.maximumf %37, %38 : vector<8x128xf32>
    %40 = vector.extract_strided_slice %39 {offsets = [0, 0], sizes = [8, 64], strides = [1, 1]} : vector<8x128xf32> to vector<8x64xf32>
    %41 = vector.extract_strided_slice %39 {offsets = [0, 64], sizes = [8, 64], strides = [1, 1]} : vector<8x128xf32> to vector<8x64xf32>
    %42 = arith.maximumf %40, %41 : vector<8x64xf32>
    %c24_31 = arith.constant 24 : index
    %c0_32 = arith.constant 0 : index
    %43 = vector.load %arg12[%c24_31, %c0_32] : memref<80x64xf32, #tpu.memory_space<vmem>>, vector<8x64xf32>
    tpu.vector_store %arg12[%c24_31, %c0_32], %42 {strides = array<i32>} : memref<80x64xf32, #tpu.memory_space<vmem>>, vector<8x64xf32>,
    %c48 = arith.constant 48 : index
    %c0_33 = arith.constant 0 : index
    %44 = vector.load %arg11[%c48, %c0_33] : memref<128x128xf32, #tpu.memory_space<vmem>>, vector<8x128xf32>
    %c56 = arith.constant 56 : index
    %c0_34 = arith.constant 0 : index
    %45 = vector.load %arg11[%c56, %c0_34] : memref<128x128xf32, #tpu.memory_space<vmem>>, vector<8x128xf32>
    %46 = arith.maximumf %44, %45 : vector<8x128xf32>
    %47 = vector.extract_strided_slice %46 {offsets = [0, 0], sizes = [8, 64], strides = [1, 1]} : vector<8x128xf32> to vector<8x64xf32>
    %48 = vector.extract_strided_slice %46 {offsets = [0, 64], sizes = [8, 64], strides = [1, 1]} : vector<8x128xf32> to vector<8x64xf32>
    %49 = arith.maximumf %47, %48 : vector<8x64xf32>
    %c32_35 = arith.constant 32 : index
    %c0_36 = arith.constant 0 : index
    %50 = vector.load %arg12[%c32_35, %c0_36] : memref<80x64xf32, #tpu.memory_space<vmem>>, vector<8x64xf32>
    tpu.vector_store %arg12[%c32_35, %c0_36], %49 {strides = array<i32>} : memref<80x64xf32, #tpu.memory_space<vmem>>, vector<8x64xf32>,
    %c64 = arith.constant 64 : index
    %c0_37 = arith.constant 0 : index
    %51 = vector.load %arg11[%c64, %c0_37] : memref<128x128xf32, #tpu.memory_space<vmem>>, vector<8x128xf32>
    %c72 = arith.constant 72 : index
    %c0_38 = arith.constant 0 : index
    %52 = vector.load %arg11[%c72, %c0_38] : memref<128x128xf32, #tpu.memory_space<vmem>>, vector<8x128xf32>
    %53 = arith.maximumf %51, %52 : vector<8x128xf32>
    %54 = vector.extract_strided_slice %53 {offsets = [0, 0], sizes = [8, 64], strides = [1, 1]} : vector<8x128xf32> to vector<8x64xf32>
    %55 = vector.extract_strided_slice %53 {offsets = [0, 64], sizes = [8, 64], strides = [1, 1]} : vector<8x128xf32> to vector<8x64xf32>
    %56 = arith.maximumf %54, %55 : vector<8x64xf32>
    %c40_39 = arith.constant 40 : index
    %c0_40 = arith.constant 0 : index
    %57 = vector.load %arg12[%c40_39, %c0_40] : memref<80x64xf32, #tpu.memory_space<vmem>>, vector<8x64xf32>
    tpu.vector_store %arg12[%c40_39, %c0_40], %56 {strides = array<i32>} : memref<80x64xf32, #tpu.memory_space<vmem>>, vector<8x64xf32>,
    %c80 = arith.constant 80 : index
    %c0_41 = arith.constant 0 : index
    %58 = vector.load %arg11[%c80, %c0_41] : memref<128x128xf32, #tpu.memory_space<vmem>>, vector<8x128xf32>
    %c88 = arith.constant 88 : index
    %c0_42 = arith.constant 0 : index
    %59 = vector.load %arg11[%c88, %c0_42] : memref<128x128xf32, #tpu.memory_space<vmem>>, vector<8x128xf32>
    %60 = arith.maximumf %58, %59 : vector<8x128xf32>
    %61 = vector.extract_strided_slice %60 {offsets = [0, 0], sizes = [8, 64], strides = [1, 1]} : vector<8x128xf32> to vector<8x64xf32>
    %62 = vector.extract_strided_slice %60 {offsets = [0, 64], sizes = [8, 64], strides = [1, 1]} : vector<8x128xf32> to vector<8x64xf32>
    %63 = arith.maximumf %61, %62 : vector<8x64xf32>
    %c48_43 = arith.constant 48 : index
    %c0_44 = arith.constant 0 : index
    %64 = vector.load %arg12[%c48_43, %c0_44] : memref<80x64xf32, #tpu.memory_space<vmem>>, vector<8x64xf32>
    tpu.vector_store %arg12[%c48_43, %c0_44], %63 {strides = array<i32>} : memref<80x64xf32, #tpu.memory_space<vmem>>, vector<8x64xf32>,
    %c96 = arith.constant 96 : index
    %c0_45 = arith.constant 0 : index
    %65 = vector.load %arg11[%c96, %c0_45] : memref<128x128xf32, #tpu.memory_space<vmem>>, vector<8x128xf32>
    %c104 = arith.constant 104 : index
    %c0_46 = arith.constant 0 : index
    %66 = vector.load %arg11[%c104, %c0_46] : memref<128x128xf32, #tpu.memory_space<vmem>>, vector<8x128xf32>
    %67 = arith.maximumf %65, %66 : vector<8x128xf32>
    %68 = vector.extract_strided_slice %67 {offsets = [0, 0], sizes = [8, 64], strides = [1, 1]} : vector<8x128xf32> to vector<8x64xf32>
    %69 = vector.extract_strided_slice %67 {offsets = [0, 64], sizes = [8, 64], strides = [1, 1]} : vector<8x128xf32> to vector<8x64xf32>
    %70 = arith.maximumf %68, %69 : vector<8x64xf32>
    %c56_47 = arith.constant 56 : index
    %c0_48 = arith.constant 0 : index
    %71 = vector.load %arg12[%c56_47, %c0_48] : memref<80x64xf32, #tpu.memory_space<vmem>>, vector<8x64xf32>
    tpu.vector_store %arg12[%c56_47, %c0_48], %70 {strides = array<i32>} : memref<80x64xf32, #tpu.memory_space<vmem>>, vector<8x64xf32>,
    %c112 = arith.constant 112 : index
    %c0_49 = arith.constant 0 : index
    %72 = vector.load %arg11[%c112, %c0_49] : memref<128x128xf32, #tpu.memory_space<vmem>>, vector<8x128xf32>
    %c120 = arith.constant 120 : index
    %c0_50 = arith.constant 0 : index
    %73 = vector.load %arg11[%c120, %c0_50] : memref<128x128xf32, #tpu.memory_space<vmem>>, vector<8x128xf32>
    %74 = arith.maximumf %72, %73 : vector<8x128xf32>
    %75 = vector.extract_strided_slice %74 {offsets = [0, 0], sizes = [8, 64], strides = [1, 1]} : vector<8x128xf32> to vector<8x64xf32>
    %76 = vector.extract_strided_slice %74 {offsets = [0, 64], sizes = [8, 64], strides = [1, 1]} : vector<8x128xf32> to vector<8x64xf32>
    %77 = arith.maximumf %75, %76 : vector<8x64xf32>
    %c64_51 = arith.constant 64 : index
    %c0_52 = arith.constant 0 : index
    %78 = vector.load %arg12[%c64_51, %c0_52] : memref<80x64xf32, #tpu.memory_space<vmem>>, vector<8x64xf32>
    tpu.vector_store %arg12[%c64_51, %c0_52], %77 {strides = array<i32>} : memref<80x64xf32, #tpu.memory_space<vmem>>, vector<8x64xf32>,
    %c0_53 = arith.constant 0 : index
    %c0_54 = arith.constant 0 : index
    %79 = vector.load %arg12[%c0_53, %c0_54] : memref<80x64xf32, #tpu.memory_space<vmem>>, vector<64x64xf32>
    %c0_55 = arith.constant 0 : index
    %c0_56 = arith.constant 0 : index
    %c0_57 = arith.constant 0 : index
    %80 = vector.load %arg4[%c0_55, %c0_56, %c0_57] : memref<3x64x128xf32, #tpu.memory_space<vmem>>, vector<1x64x128xf32>
    %81 = vector.shape_cast %80 : vector<1x64x128xf32> to vector<64x128xf32>
    %cst_58 = arith.constant dense<0.000000e+00> : vector<64x128xf32>
    %82 = tpu.matmul %79, %81, %cst_58 {dimension_numbers = #tpu.dot_dimension_numbers<[1], [0], [0], [1], [0, 0, 1, 1], [], []>} : vector<64x64xf32>, vector<64x128xf32>, vector<64x128xf32> -> vector<64x128xf32>
    %c8_59 = arith.constant 8 : index
    %c0_60 = arith.constant 0 : index
    %83 = vector.load %arg12[%c8_59, %c0_60] : memref<80x64xf32, #tpu.memory_space<vmem>>, vector<64x64xf32>
    %c1_61 = arith.constant 1 : index
    %c0_62 = arith.constant 0 : index
    %c0_63 = arith.constant 0 : index
    %84 = vector.load %arg4[%c1_61, %c0_62, %c0_63] : memref<3x64x128xf32, #tpu.memory_space<vmem>>, vector<1x64x128xf32>
    %85 = vector.shape_cast %84 : vector<1x64x128xf32> to vector<64x128xf32>
    %cst_64 = arith.constant dense<0.000000e+00> : vector<64x128xf32>
    %86 = tpu.matmul %83, %85, %cst_64 {dimension_numbers = #tpu.dot_dimension_numbers<[1], [0], [0], [1], [0, 0, 1, 1], [], []>} : vector<64x64xf32>, vector<64x128xf32>, vector<64x128xf32> -> vector<64x128xf32>
    %87 = arith.addf %82, %86 : vector<64x128xf32>
    %c16_65 = arith.constant 16 : index
    %c0_66 = arith.constant 0 : index
    %88 = vector.load %arg12[%c16_65, %c0_66] : memref<80x64xf32, #tpu.memory_space<vmem>>, vector<64x64xf32>
    %c2_67 = arith.constant 2 : index
    %c0_68 = arith.constant 0 : index
    %c0_69 = arith.constant 0 : index
    %89 = vector.load %arg4[%c2_67, %c0_68, %c0_69] : memref<3x64x128xf32, #tpu.memory_space<vmem>>, vector<1x64x128xf32>
    %90 = vector.shape_cast %89 : vector<1x64x128xf32> to vector<64x128xf32>
    %cst_70 = arith.constant dense<0.000000e+00> : vector<64x128xf32>
    %91 = tpu.matmul %88, %90, %cst_70 {dimension_numbers = #tpu.dot_dimension_numbers<[1], [0], [0], [1], [0, 0, 1, 1], [], []>} : vector<64x64xf32>, vector<64x128xf32>, vector<64x128xf32> -> vector<64x128xf32>
    %92 = arith.addf %87, %91 : vector<64x128xf32>
    %c0_71 = arith.constant 0 : index
    %c0_72 = arith.constant 0 : index
    %93 = vector.load %arg5[%c0_71, %c0_72] : memref<1x128xf32, #tpu.memory_space<vmem>>, vector<1x128xf32>
    %94 = vector.broadcast %93 : vector<1x128xf32> to vector<64x128xf32>
    %95 = arith.addf %92, %94 : vector<64x128xf32>
    %cst_73 = arith.constant 0.000000e+00 : f32
    %96 = vector.broadcast %cst_73 : f32 to vector<64x128xf32>
    %97 = arith.maximumf %95, %96 : vector<64x128xf32>
    %c0_74 = arith.constant 0 : index
    %c0_75 = arith.constant 0 : index
    %98 = vector.load %arg13[%c0_74, %c0_75] : memref<64x128xf32, #tpu.memory_space<vmem>>, vector<64x128xf32>
    tpu.vector_store %arg13[%c0_74, %c0_75], %97 {strides = array<i32>} : memref<64x128xf32, #tpu.memory_space<vmem>>, vector<64x128xf32>,
    %c0_76 = arith.constant 0 : index
    %c0_77 = arith.constant 0 : index
    %99 = vector.load %arg13[%c0_76, %c0_77] : memref<64x128xf32, #tpu.memory_space<vmem>>, vector<8x128xf32>
    %c8_78 = arith.constant 8 : index
    %c0_79 = arith.constant 0 : index
    %100 = vector.load %arg13[%c8_78, %c0_79] : memref<64x128xf32, #tpu.memory_space<vmem>>, vector<8x128xf32>
    %101 = arith.maximumf %99, %100 : vector<8x128xf32>
    %102 = vector.extract_strided_slice %101 {offsets = [0, 0], sizes = [8, 64], strides = [1, 1]} : vector<8x128xf32> to vector<8x64xf32>
    %103 = vector.extract_strided_slice %101 {offsets = [0, 64], sizes = [8, 64], strides = [1, 1]} : vector<8x128xf32> to vector<8x64xf32>
    %104 = arith.maximumf %102, %103 : vector<8x64xf32>
    %c0_80 = arith.constant 0 : index
    %c0_81 = arith.constant 0 : index
    %c0_82 = arith.constant 0 : index
    %105 = vector.load %arg6[%c0_80, %c0_81, %c0_82] : memref<4x64x32xf32, #tpu.memory_space<vmem>>, vector<1x64x32xf32>
    %106 = vector.shape_cast %105 : vector<1x64x32xf32> to vector<64x32xf32>
    %cst_83 = arith.constant dense<0.000000e+00> : vector<8x32xf32>
    %107 = tpu.matmul %104, %106, %cst_83 {dimension_numbers = #tpu.dot_dimension_numbers<[1], [0], [0], [1], [0, 0, 1, 1], [], []>} : vector<8x64xf32>, vector<64x32xf32>, vector<8x32xf32> -> vector<8x32xf32>
    %c16_84 = arith.constant 16 : index
    %c0_85 = arith.constant 0 : index
    %108 = vector.load %arg13[%c16_84, %c0_85] : memref<64x128xf32, #tpu.memory_space<vmem>>, vector<8x128xf32>
    %c24_86 = arith.constant 24 : index
    %c0_87 = arith.constant 0 : index
    %109 = vector.load %arg13[%c24_86, %c0_87] : memref<64x128xf32, #tpu.memory_space<vmem>>, vector<8x128xf32>
    %110 = arith.maximumf %108, %109 : vector<8x128xf32>
    %111 = vector.extract_strided_slice %110 {offsets = [0, 0], sizes = [8, 64], strides = [1, 1]} : vector<8x128xf32> to vector<8x64xf32>
    %112 = vector.extract_strided_slice %110 {offsets = [0, 64], sizes = [8, 64], strides = [1, 1]} : vector<8x128xf32> to vector<8x64xf32>
    %113 = arith.maximumf %111, %112 : vector<8x64xf32>
    %c1_88 = arith.constant 1 : index
    %c0_89 = arith.constant 0 : index
    %c0_90 = arith.constant 0 : index
    %114 = vector.load %arg6[%c1_88, %c0_89, %c0_90] : memref<4x64x32xf32, #tpu.memory_space<vmem>>, vector<1x64x32xf32>
    %115 = vector.shape_cast %114 : vector<1x64x32xf32> to vector<64x32xf32>
    %cst_91 = arith.constant dense<0.000000e+00> : vector<8x32xf32>
    %116 = tpu.matmul %113, %115, %cst_91 {dimension_numbers = #tpu.dot_dimension_numbers<[1], [0], [0], [1], [0, 0, 1, 1], [], []>} : vector<8x64xf32>, vector<64x32xf32>, vector<8x32xf32> -> vector<8x32xf32>
    %117 = arith.addf %107, %116 : vector<8x32xf32>
    %c32_92 = arith.constant 32 : index
    %c0_93 = arith.constant 0 : index
    %118 = vector.load %arg13[%c32_92, %c0_93] : memref<64x128xf32, #tpu.memory_space<vmem>>, vector<8x128xf32>
    %c40_94 = arith.constant 40 : index
    %c0_95 = arith.constant 0 : index
    %119 = vector.load %arg13[%c40_94, %c0_95] : memref<64x128xf32, #tpu.memory_space<vmem>>, vector<8x128xf32>
    %120 = arith.maximumf %118, %119 : vector<8x128xf32>
    %121 = vector.extract_strided_slice %120 {offsets = [0, 0], sizes = [8, 64], strides = [1, 1]} : vector<8x128xf32> to vector<8x64xf32>
    %122 = vector.extract_strided_slice %120 {offsets = [0, 64], sizes = [8, 64], strides = [1, 1]} : vector<8x128xf32> to vector<8x64xf32>
    %123 = arith.maximumf %121, %122 : vector<8x64xf32>
    %c2_96 = arith.constant 2 : index
    %c0_97 = arith.constant 0 : index
    %c0_98 = arith.constant 0 : index
    %124 = vector.load %arg6[%c2_96, %c0_97, %c0_98] : memref<4x64x32xf32, #tpu.memory_space<vmem>>, vector<1x64x32xf32>
    %125 = vector.shape_cast %124 : vector<1x64x32xf32> to vector<64x32xf32>
    %cst_99 = arith.constant dense<0.000000e+00> : vector<8x32xf32>
    %126 = tpu.matmul %123, %125, %cst_99 {dimension_numbers = #tpu.dot_dimension_numbers<[1], [0], [0], [1], [0, 0, 1, 1], [], []>} : vector<8x64xf32>, vector<64x32xf32>, vector<8x32xf32> -> vector<8x32xf32>
    %127 = arith.addf %117, %126 : vector<8x32xf32>
    %c48_100 = arith.constant 48 : index
    %c0_101 = arith.constant 0 : index
    %128 = vector.load %arg13[%c48_100, %c0_101] : memref<64x128xf32, #tpu.memory_space<vmem>>, vector<8x128xf32>
    %c56_102 = arith.constant 56 : index
    %c0_103 = arith.constant 0 : index
    %129 = vector.load %arg13[%c56_102, %c0_103] : memref<64x128xf32, #tpu.memory_space<vmem>>, vector<8x128xf32>
    %130 = arith.maximumf %128, %129 : vector<8x128xf32>
    %131 = vector.extract_strided_slice %130 {offsets = [0, 0], sizes = [8, 64], strides = [1, 1]} : vector<8x128xf32> to vector<8x64xf32>
    %132 = vector.extract_strided_slice %130 {offsets = [0, 64], sizes = [8, 64], strides = [1, 1]} : vector<8x128xf32> to vector<8x64xf32>
    %133 = arith.maximumf %131, %132 : vector<8x64xf32>
    %c3 = arith.constant 3 : index
    %c0_104 = arith.constant 0 : index
    %c0_105 = arith.constant 0 : index
    %134 = vector.load %arg6[%c3, %c0_104, %c0_105] : memref<4x64x32xf32, #tpu.memory_space<vmem>>, vector<1x64x32xf32>
    %135 = vector.shape_cast %134 : vector<1x64x32xf32> to vector<64x32xf32>
    %cst_106 = arith.constant dense<0.000000e+00> : vector<8x32xf32>
    %136 = tpu.matmul %133, %135, %cst_106 {dimension_numbers = #tpu.dot_dimension_numbers<[1], [0], [0], [1], [0, 0, 1, 1], [], []>} : vector<8x64xf32>, vector<64x32xf32>, vector<8x32xf32> -> vector<8x32xf32>
    %137 = arith.addf %127, %136 : vector<8x32xf32>
    %c0_107 = arith.constant 0 : index
    %c0_108 = arith.constant 0 : index
    %138 = vector.load %arg7[%c0_107, %c0_108] : memref<1x32xf32, #tpu.memory_space<vmem>>, vector<1x32xf32>
    %139 = vector.broadcast %138 : vector<1x32xf32> to vector<8x32xf32>
    %140 = arith.addf %137, %139 : vector<8x32xf32>
    %cst_109 = arith.constant 0.000000e+00 : f32
    %141 = vector.broadcast %cst_109 : f32 to vector<8x32xf32>
    %142 = arith.maximumf %140, %141 : vector<8x32xf32>
    %c0_110 = arith.constant 0 : index
    %c0_111 = arith.constant 0 : index
    %143 = vector.load %arg8[%c0_110, %c0_111] : memref<32x128xf32, #tpu.memory_space<vmem>>, vector<32x128xf32>
    %cst_112 = arith.constant dense<0.000000e+00> : vector<8x128xf32>
    %144 = tpu.matmul %142, %143, %cst_112 {dimension_numbers = #tpu.dot_dimension_numbers<[1], [0], [0], [1], [0, 0, 1, 1], [], []>} : vector<8x32xf32>, vector<32x128xf32>, vector<8x128xf32> -> vector<8x128xf32>
    %c0_113 = arith.constant 0 : index
    %c0_114 = arith.constant 0 : index
    %145 = vector.load %arg9[%c0_113, %c0_114] : memref<1x128xf32, #tpu.memory_space<vmem>>, vector<1x128xf32>
    %146 = vector.broadcast %145 : vector<1x128xf32> to vector<8x128xf32>
    %147 = arith.addf %144, %146 : vector<8x128xf32>
    %c0_115 = arith.constant 0 : index
    %c0_116 = arith.constant 0 : index
    %148 = vector.load %arg10[%c0_115, %c0_116] : memref<8x128xf32, #tpu.memory_space<vmem>>, vector<8x128xf32>
    tpu.vector_store %arg10[%c0_115, %c0_116], %147 {strides = array<i32>} : memref<8x128xf32, #tpu.memory_space<vmem>>, vector<8x128xf32>,
    return
  }
  func.func @transform_0(%arg0: i32) -> (i32, i32) {
    %c0_i32 = arith.constant 0 : i32
    %c0_i32_0 = arith.constant 0 : i32
    return %arg0, %c0_i32 : i32, i32
  }
  func.func @transform_1(%arg0: i32) -> (i32, i32, i32) {
    %c0_i32 = arith.constant 0 : i32
    %c0_i32_0 = arith.constant 0 : i32
    %c0_i32_1 = arith.constant 0 : i32
    %c0_i32_2 = arith.constant 0 : i32
    return %c0_i32, %c0_i32_0, %c0_i32_1 : i32, i32, i32
  }
  func.func @transform_2(%arg0: i32) -> (i32, i32) {
    %c0_i32 = arith.constant 0 : i32
    %c0_i32_0 = arith.constant 0 : i32
    %c0_i32_1 = arith.constant 0 : i32
    return %c0_i32, %c0_i32_0 : i32, i32
  }
  func.func @transform_3(%arg0: i32) -> (i32, i32, i32) {
    %c0_i32 = arith.constant 0 : i32
    %c0_i32_0 = arith.constant 0 : i32
    %c0_i32_1 = arith.constant 0 : i32
    %c0_i32_2 = arith.constant 0 : i32
    return %c0_i32, %c0_i32_0, %c0_i32_1 : i32, i32, i32
  }
  func.func @transform_4(%arg0: i32) -> (i32, i32) {
    %c0_i32 = arith.constant 0 : i32
    %c0_i32_0 = arith.constant 0 : i32
    %c0_i32_1 = arith.constant 0 : i32
    return %c0_i32, %c0_i32_0 : i32, i32
  }
  func.func @transform_5(%arg0: i32) -> (i32, i32, i32) {
    %c0_i32 = arith.constant 0 : i32
    %c0_i32_0 = arith.constant 0 : i32
    %c0_i32_1 = arith.constant 0 : i32
    %c0_i32_2 = arith.constant 0 : i32
    return %c0_i32, %c0_i32_0, %c0_i32_1 : i32, i32, i32
  }
  func.func @transform_6(%arg0: i32) -> (i32, i32) {
    %c0_i32 = arith.constant 0 : i32
    %c0_i32_0 = arith.constant 0 : i32
    %c0_i32_1 = arith.constant 0 : i32
    return %c0_i32, %c0_i32_0 : i32, i32
  }
  func.func @transform_7(%arg0: i32) -> (i32, i32) {
    %c0_i32 = arith.constant 0 : i32
    %c0_i32_0 = arith.constant 0 : i32
    %c0_i32_1 = arith.constant 0 : i32
    return %c0_i32, %c0_i32_0 : i32, i32
  }
  func.func @transform_8(%arg0: i32) -> (i32, i32) {
    %c0_i32 = arith.constant 0 : i32
    %c0_i32_0 = arith.constant 0 : i32
    %c0_i32_1 = arith.constant 0 : i32
    return %c0_i32, %c0_i32_0 : i32, i32
  }
  func.func @transform_9(%arg0: i32) -> (i32, i32) {
    %c0_i32 = arith.constant 0 : i32
    %c0_i32_0 = arith.constant 0 : i32
    return %arg0, %c0_i32 : i32, i32
  }
}

</mosaic_0001>

<llo_original>
// kernel: tile.13
$region0: #{tile.13}
  #allocation0 [shape = 's32[1]{0}', space=sflag, size = 0x4, scoped, tag = 'scoped memory for tile.13']
  %s0 = inlined_call_operand.vmem [shape: f32[8], index: 0, kind: input, shape index: {}]
  %s1 = inlined_call_operand.vmem [shape: f32[16,8], index: 1, kind: output, shape index: {}]
  // Predicated region
  $region2: #{tile.13} parent=0 // pred_check
    _
  $region3: #{tile.13} parent=0 // pred_check_branch
    %3 = sbr.rel (0) target = $region5
  $region4: #{tile.13} parent=0 // pred_region
    _
  $region5: #{tile.13} parent=0 // pred_fallthru
    _
  %v4 = vld [vmem:[%s0] ss:$0 sm:$0xff]
  %5 = vst [vmem:[%s1] sm:$0xff] %v4
  %s6 = scalar_lea.vmem %s1, 8
  %7 = vst [vmem:[%s6] sm:$0xff] %v4

// kernel: tile.14
$region0: #{tile.14}
  %s0 = inlined_call_operand.vmem [shape: f32[16,8], index: 0, kind: input, shape index: {}]
  %s1 = inlined_call_operand.hbm [shape: f32[1,128], index: 1, kind: output, shape index: {}]
  $region1: #{tile.14} parent=0
    #allocation0 [shape = 'u8[512]{0}', space=vmem, size = 0x400, scoped, tag = 'operand span for operand 1']
    #allocation1 [shape = 's32[1]{0}', space=sflag, size = 0x4, scoped, tag = 'scoped memory for tile.14']
    #allocation2 [shape = 'u8[4096]{0}', space=vmem, size = 0x1000, scoped, tag = 'scoped mem for output reshape']
    %2 = vsyncpa [#allocation1], 0
    %v3 = vld [vmem:[%s0] sm:$0x1]
    %vm4 = vcmask 64512
    %5 = vst.msk [vmem:[#allocation2] sm:$0x1] %vm4, %v3
    %s6 = scalar_lea.vmem %s0, 15
    %v7 = vld [vmem:[%s6] sm:$0x1]
    %8 = vrot.lane.b32.xlu0 %v7, 120
    %v9 = vpop.permute.xlu0 %8
    %vm10 = vcmask 1048512
    %11 = vst.msk [vmem:[#allocation2] sm:$0x1] %vm10, %v9
    %s12 = scalar_lea.vmem %s0, 14
    %v13 = vld [vmem:[%s12] sm:$0x1]
    %14 = vrot.lane.b32.xlu0 %v13, 112
    %v15 = vpop.permute.xlu0 %14
    %vm16 = vcmask 982912
    %17 = vst.msk [vmem:[#allocation2] sm:$0x1] %vm16, %v15
    %s18 = scalar_lea.vmem %s0, 13
    %v19 = vld [vmem:[%s18] sm:$0x1]
    %20 = vrot.lane.b32.xlu0 %v19, 104
    %v21 = vpop.permute.xlu0 %20
    %vm22 = vcmask 917312
    %23 = vst.msk [vmem:[#allocation2] sm:$0x1] %vm22, %v21
    %s24 = scalar_lea.vmem %s0, 12
    %v25 = vld [vmem:[%s24] sm:$0x1]
    %26 = vrot.lane.b32.xlu0 %v25, 96
    %v27 = vpop.permute.xlu0 %26
    %vm28 = vcmask 851712
    %29 = vst.msk [vmem:[#allocation2] sm:$0x1] %vm28, %v27
    %s30 = scalar_lea.vmem %s0, 11
    %v31 = vld [vmem:[%s30] sm:$0x1]
    %32 = vrot.lane.b32.xlu0 %v31, 88
    %v33 = vpop.permute.xlu0 %32
    %vm34 = vcmask 786112
    %35 = vst.msk [vmem:[#allocation2] sm:$0x1] %vm34, %v33
    %s36 = scalar_lea.vmem %s0, 10
    %v37 = vld [vmem:[%s36] sm:$0x1]
    %38 = vrot.lane.b32.xlu0 %v37, 80
    %v39 = vpop.permute.xlu0 %38
    %vm40 = vcmask 720512
    %41 = vst.msk [vmem:[#allocation2] sm:$0x1] %vm40, %v39
    %s42 = scalar_lea.vmem %s0, 9
    %v43 = vld [vmem:[%s42] sm:$0x1]
    %44 = vrot.lane.b32.xlu0 %v43, 72
    %v45 = vpop.permute.xlu0 %44
    %vm46 = vcmask 654912
    %47 = vst.msk [vmem:[#allocation2] sm:$0x1] %vm46, %v45
    %s48 = scalar_lea.vmem %s0, 8
    %v49 = vld [vmem:[%s48] sm:$0x1]
    %50 = vrot.lane.b32.xlu0 %v49, 64
    %v51 = vpop.permute.xlu0 %50
    %vm52 = vcmask 589312
    %53 = vst.msk [vmem:[#allocation2] sm:$0x1] %vm52, %v51
    %s54 = scalar_lea.vmem %s0, 7
    %v55 = vld [vmem:[%s54] sm:$0x1]
    %56 = vrot.lane.b32.xlu0 %v55, 56
    %v57 = vpop.permute.xlu0 %56
    %vm58 = vcmask 523712
    %59 = vst.msk [vmem:[#allocation2] sm:$0x1] %vm58, %v57
    %s60 = scalar_lea.vmem %s0, 6
    %v61 = vld [vmem:[%s60] sm:$0x1]
    %62 = vrot.lane.b32.xlu0 %v61, 48
    %v63 = vpop.permute.xlu0 %62
    %vm64 = vcmask 458112
    %65 = vst.msk [vmem:[#allocation2] sm:$0x1] %vm64, %v63
    %s66 = scalar_lea.vmem %s0, 5
    %v67 = vld [vmem:[%s66] sm:$0x1]
    %68 = vrot.lane.b32.xlu0 %v67, 40
    %v69 = vpop.permute.xlu0 %68
    %vm70 = vcmask 392512
    %71 = vst.msk [vmem:[#allocation2] sm:$0x1] %vm70, %v69
    %s72 = scalar_lea.vmem %s0, 4
    %v73 = vld [vmem:[%s72] sm:$0x1]
    %74 = vrot.lane.b32.xlu0 %v73, 32
    %v75 = vpop.permute.xlu0 %74
    %vm76 = vcmask 326912
    %77 = vst.msk [vmem:[#allocation2] sm:$0x1] %vm76, %v75
    %s78 = scalar_lea.vmem %s0, 3
    %v79 = vld [vmem:[%s78] sm:$0x1]
    %80 = vrot.lane.b32.xlu0 %v79, 24
    %v81 = vpop.permute.xlu0 %80
    %vm82 = vcmask 261312
    %83 = vst.msk [vmem:[#allocation2] sm:$0x1] %vm82, %v81
    %s84 = scalar_lea.vmem %s0, 2
    %v85 = vld [vmem:[%s84] sm:$0x1]
    %86 = vrot.lane.b32.xlu0 %v85, 16
    %v87 = vpop.permute.xlu0 %86
    %vm88 = vcmask 195712
    %89 = vst.msk [vmem:[#allocation2] sm:$0x1] %vm88, %v87
    %s90 = scalar_lea.vmem %s0, 1
    %v91 = vld [vmem:[%s90] sm:$0x1]
    %92 = vrot.lane.b32.xlu0 %v91, 8
    %v93 = vpop.permute.xlu0 %92
    %vm94 = vcmask 130112
    %95 = vst.msk [vmem:[#allocation2] sm:$0x1] %vm94, %v93
    %s97 = sshll.u32 1, 1
    %s98 = ssub.s32 %s97, 1
    %v100 = vld [vmem:[#allocation2] sm:%s98]
    %s101 = sshll.u32 1, 1
    %s102 = ssub.s32 %s101, 1
    %103 = vst [vmem:[#allocation0] sm:%s102] %v100
    %s105 = ssub.s32 16, 16
    %106 = vsyncadd [#allocation1], %s105
    %s108 = sshll.u32 [#allocation0], 4
    %s109 = int_to_ptr.vmem [resolvable:$true] %s108
    %111 = dma.vmem_to_hbm [thread:$0]  %s109, 16, %s1, [#allocation1]
    %112 = dma.done [#allocation1], 16
    %113 = vsyncpa [#allocation1], 1

// kernel: tile.18
$region0: #{tile.18}
  #allocation0 [shape = 's32[1]{0}', space=sflag, size = 0x4, scoped, tag = 'scoped memory for tile.18']
  %s0 = inlined_call_operand.vmem [shape: f32[16], index: 0, kind: input, shape index: {}]
  %s1 = inlined_call_operand.vmem [shape: f32[8,16], index: 1, kind: output, shape index: {}]
  // Predicated region
  $region2: #{tile.18} parent=0 // pred_check
    _
  $region3: #{tile.18} parent=0 // pred_check_branch
    %3 = sbr.rel (0) target = $region5
  $region4: #{tile.18} parent=0 // pred_region
    _
  $region5: #{tile.18} parent=0 // pred_fallthru
    _
  %v4 = vld [vmem:[%s0] ss:$0 sm:$0xff]
  %5 = vst [vmem:[%s1] sm:$0xff] %v4

// kernel: tile.19
$region0: #{tile.19}
  %s0 = inlined_call_operand.vmem [shape: f32[8,16], index: 0, kind: input, shape index: {}]
  %s1 = inlined_call_operand.hbm [shape: f32[1,128], index: 1, kind: output, shape index: {}]
  $region1: #{tile.19} parent=0
    #allocation0 [shape = 'u8[512]{0}', space=vmem, size = 0x400, scoped, tag = 'operand span for operand 1']
    #allocation1 [shape = 's32[1]{0}', space=sflag, size = 0x4, scoped, tag = 'scoped memory for tile.19']
    #allocation2 [shape = 'u8[4096]{0}', space=vmem, size = 0x1000, scoped, tag = 'scoped mem for output reshape']
    %2 = vsyncpa [#allocation1], 0
    %v3 = vld [vmem:[%s0] sm:$0x1]
    %vm4 = vcmask 130048
    %5 = vst.msk [vmem:[#allocation2] sm:$0x1] %vm4, %v3
    %s6 = scalar_lea.vmem %s0, 7
    %v7 = vld [vmem:[%s6] sm:$0x1]
    %8 = vrot.lane.b32.xlu0 %v7, 112
    %v9 = vpop.permute.xlu0 %8
    %vm10 = vcmask 1048448
    %11 = vst.msk [vmem:[#allocation2] sm:$0x1] %vm10, %v9
    %s12 = scalar_lea.vmem %s0, 6
    %v13 = vld [vmem:[%s12] sm:$0x1]
    %14 = vrot.lane.b32.xlu0 %v13, 96
    %v15 = vpop.permute.xlu0 %14
    %vm16 = vcmask 917248
    %17 = vst.msk [vmem:[#allocation2] sm:$0x1] %vm16, %v15
    %s18 = scalar_lea.vmem %s0, 5
    %v19 = vld [vmem:[%s18] sm:$0x1]
    %20 = vrot.lane.b32.xlu0 %v19, 80
    %v21 = vpop.permute.xlu0 %20
    %vm22 = vcmask 786048
    %23 = vst.msk [vmem:[#allocation2] sm:$0x1] %vm22, %v21
    %s24 = scalar_lea.vmem %s0, 4
    %v25 = vld [vmem:[%s24] sm:$0x1]
    %26 = vrot.lane.b32.xlu0 %v25, 64
    %v27 = vpop.permute.xlu0 %26
    %vm28 = vcmask 654848
    %29 = vst.msk [vmem:[#allocation2] sm:$0x1] %vm28, %v27
    %s30 = scalar_lea.vmem %s0, 3
    %v31 = vld [vmem:[%s30] sm:$0x1]
    %32 = vrot.lane.b32.xlu0 %v31, 48
    %v33 = vpop.permute.xlu0 %32
    %vm34 = vcmask 523648
    %35 = vst.msk [vmem:[#allocation2] sm:$0x1] %vm34, %v33
    %s36 = scalar_lea.vmem %s0, 2
    %v37 = vld [vmem:[%s36] sm:$0x1]
    %38 = vrot.lane.b32.xlu0 %v37, 32
    %v39 = vpop.permute.xlu0 %38
    %vm40 = vcmask 392448
    %41 = vst.msk [vmem:[#allocation2] sm:$0x1] %vm40, %v39
    %s42 = scalar_lea.vmem %s0, 1
    %v43 = vld [vmem:[%s42] sm:$0x1]
    %44 = vrot.lane.b32.xlu0 %v43, 16
    %v45 = vpop.permute.xlu0 %44
    %vm46 = vcmask 261248
    %47 = vst.msk [vmem:[#allocation2] sm:$0x1] %vm46, %v45
    %s49 = sshll.u32 1, 1
    %s50 = ssub.s32 %s49, 1
    %v52 = vld [vmem:[#allocation2] sm:%s50]
    %s53 = sshll.u32 1, 1
    %s54 = ssub.s32 %s53, 1
    %55 = vst [vmem:[#allocation0] sm:%s54] %v52
    %s57 = ssub.s32 16, 16
    %58 = vsyncadd [#allocation1], %s57
    %s60 = sshll.u32 [#allocation0], 4
    %s61 = int_to_ptr.vmem [resolvable:$true] %s60
    %63 = dma.vmem_to_hbm [thread:$0]  %s61, 16, %s1, [#allocation1]
    %64 = dma.done [#allocation1], 16
    %65 = vsyncpa [#allocation1], 1

// kernel: svhn_forward.1
$region0: #{svhn_forward.1}
  #allocation0 [shape = 'u32[]', space=smem, size = 0x4, offset = 0x4, fixed_abs, tag = 'smem constant byte address 0x4 - core index']
  #allocation1 [shape = 'u32[144,128]{1,0:T(1,128)}', space=vmem, size = 0x12000, scoped, tag = 'internal scratch']
  #allocation2 [shape = 'f32[128,128]{1,0:T(8,128)}', space=vmem, size = 0x10000, scoped, tag = 'scratch operand']
  #allocation3 [shape = 'f32[80,64]{1,0:T(8,128)}', space=vmem, size = 0xa000, scoped, tag = 'scratch operand']
  #allocation4 [shape = 'f32[64,128]{1,0:T(8,128)}', space=vmem, size = 0x8000, scoped, tag = 'scratch operand']
  %s0 = inlined_call_operand.vmem [shape: f32[144,72], index: 0, kind: input, shape index: {}]
  %s1 = inlined_call_operand.hbm [shape: f32[3,72,128], index: 1, kind: input, shape index: {}]
  %s2 = inlined_call_operand.vmem [shape: f32[1,128], index: 2, kind: input, shape index: {}]
  %s3 = inlined_call_operand.vmem [shape: f32[3,64,128], index: 3, kind: input, shape index: {}]
  %s4 = inlined_call_operand.vmem [shape: f32[1,128], index: 4, kind: input, shape index: {}]
  %s5 = inlined_call_operand.vmem [shape: f32[4,64,32], index: 5, kind: input, shape index: {}]
  %s6 = inlined_call_operand.vmem [shape: f32[1,32], index: 6, kind: input, shape index: {}]
  %s7 = inlined_call_operand.hbm [shape: f32[32,128], index: 7, kind: input, shape index: {}]
  %s8 = inlined_call_operand.vmem [shape: f32[1,128], index: 8, kind: input, shape index: {}]
  %s9 = inlined_call_operand.vmem [shape: f32[8,128], index: 9, kind: output, shape index: {}]
  %s10 = sld [smem:[#allocation0]]
  $region58: #{svhn_forward.1} parent=0
    _
  %s12 = ssub.s32 1, %s10
  %s13 = scalar_select 0, %s12, %s10
  $region1: #{svhn_forward.1} parent=0
    #allocation5 [shape = 'u8[110592]{0}', space=vmem, size = 0x1b000, scoped, tag = 'input window, operand 1, single buffered']
    #allocation6 [shape = 's32[1]{0}', space=sflag, size = 0x4, scoped, tag = 'scoped memory for svhn_forward.1']
    #allocation7 [shape = 'u8[16384]{0}', space=vmem, size = 0x4000, scoped, tag = 'input window, operand 7, single buffered']
    #allocation8 [shape = 's32[1]{0}', space=sflag, size = 0x4, scoped, tag = 'scoped memory for svhn_forward.1']
    %14 = vsyncpa [#allocation6], 0
    %15 = vsyncpa [#allocation8], 0
    // Predicated region
    $region2: #{svhn_forward.1} parent=1 // pred_check
      _
    $region3: #{svhn_forward.1} parent=1 // pred_check_branch
      %17 = sbr.rel (0) target = $region5
    $region4: #{svhn_forward.1} parent=1 // pred_region
      _
    $region5: #{svhn_forward.1} parent=1 // pred_fallthru
      _
    // Predicated region
    $region6: #{svhn_forward.1} parent=1 // pred_check
      _
    $region7: #{svhn_forward.1} parent=1 // pred_check_branch
      %19 = sbr.rel (0) target = $region9
    $region8: #{svhn_forward.1} parent=1 // pred_region
      %s21 = ssub.s32 3456, 3456
      %22 = vsyncadd [#allocation6], %s21
      %s23 = sshll.u32 [#allocation5], 4
      %s24 = int_to_ptr.vmem [resolvable:$true] %s23
      %29 = dma.hbm_to_vmem [thread:$0]  %s1, 3456, %s24, [#allocation6], 128, 128, 8
    $region9: #{svhn_forward.1} parent=1 // pred_fallthru
      _
    // Predicated region
    $region10: #{svhn_forward.1} parent=1 // pred_check
      _
    $region11: #{svhn_forward.1} parent=1 // pred_check_branch
      %31 = sbr.rel (0) target = $region13
    $region12: #{svhn_forward.1} parent=1 // pred_region
      _
    $region13: #{svhn_forward.1} parent=1 // pred_fallthru
      _
    // Predicated region
    $region14: #{svhn_forward.1} parent=1 // pred_check
      _
    $region15: #{svhn_forward.1} parent=1 // pred_check_branch
      %33 = sbr.rel (0) target = $region17
    $region16: #{svhn_forward.1} parent=1 // pred_region
      _
    $region17: #{svhn_forward.1} parent=1 // pred_fallthru
      _
    // Predicated region
    $region18: #{svhn_forward.1} parent=1 // pred_check
      _
    $region19: #{svhn_forward.1} parent=1 // pred_check_branch
      %35 = sbr.rel (0) target = $region21
    $region20: #{svhn_forward.1} parent=1 // pred_region
      _
    $region21: #{svhn_forward.1} parent=1 // pred_fallthru
      _
    // Predicated region
    $region22: #{svhn_forward.1} parent=1 // pred_check
      _
    $region23: #{svhn_forward.1} parent=1 // pred_check_branch
      %37 = sbr.rel (0) target = $region25
    $region24: #{svhn_forward.1} parent=1 // pred_region
      _
    $region25: #{svhn_forward.1} parent=1 // pred_fallthru
      _
    // Predicated region
    $region26: #{svhn_forward.1} parent=1 // pred_check
      _
    $region27: #{svhn_forward.1} parent=1 // pred_check_branch
      %39 = sbr.rel (0) target = $region29
    $region28: #{svhn_forward.1} parent=1 // pred_region
      _
    $region29: #{svhn_forward.1} parent=1 // pred_fallthru
      _
    // Predicated region
    $region30: #{svhn_forward.1} parent=1 // pred_check
      _
    $region31: #{svhn_forward.1} parent=1 // pred_check_branch
      %41 = sbr.rel (0) target = $region33
    $region32: #{svhn_forward.1} parent=1 // pred_region
      %s43 = ssub.s32 512, 512
      %44 = vsyncadd [#allocation8], %s43
      %s45 = sshll.u32 [#allocation7], 4
      %s46 = int_to_ptr.vmem [resolvable:$true] %s45
      %51 = dma.hbm_to_vmem [thread:$0]  %s7, 512, %s46, [#allocation8], 128, 128, 8
    $region33: #{svhn_forward.1} parent=1 // pred_fallthru
      _
    // Predicated region
    $region34: #{svhn_forward.1} parent=1 // pred_check
      _
    $region35: #{svhn_forward.1} parent=1 // pred_check_branch
      %53 = sbr.rel (0) target = $region37
    $region36: #{svhn_forward.1} parent=1 // pred_region
      _
    $region37: #{svhn_forward.1} parent=1 // pred_fallthru
      _
    // Predicated region
    $region38: #{svhn_forward.1} parent=1 // pred_check
      _
    $region39: #{svhn_forward.1} parent=1 // pred_check_branch
      %55 = sbr.rel (0) target = $region41
    $region40: #{svhn_forward.1} parent=1 // pred_region
      %56 = dma.done [#allocation6], 3456
    $region41: #{svhn_forward.1} parent=1 // pred_fallthru
      _
    // Predicated region
    $region42: #{svhn_forward.1} parent=1 // pred_check
      _
    $region43: #{svhn_forward.1} parent=1 // pred_check_branch
      %58 = sbr.rel (0) target = $region45
    $region44: #{svhn_forward.1} parent=1 // pred_region
      %59 = dma.done [#allocation8], 512
    $region45: #{svhn_forward.1} parent=1 // pred_fallthru
      _
    %p60 = scmp.eq.s32.totalorder 0, 0
    // Predicated region
    $region46: #{svhn_forward.1} parent=1 // pred_check
      %p61 = pneg %p60
    $region47: #{svhn_forward.1} parent=1 // pred_check_branch
      %63 = sbr.rel (%p61) target = $region49
    $region48: #{svhn_forward.1} parent=1 // pred_region
      %vm64 = vcmask 523264
      %65 = vst.msk [vmem:[#allocation3] sm:$0xff] %vm64, 0.0
      %66 = vst.msk [vmem:[#allocation3 + $0x48] sm:$0xff] %vm64, 0.0
    $region49: #{svhn_forward.1} parent=1 // pred_fallthru
      _
    %v67 = vld [vmem:[%s0] sm:$0xff]
    %v68 = vld [vmem:[%s0 + $0x8] sm:$0xff]
    %v69 = vld [vmem:[%s0 + $0x10] sm:$0xff]
    %v70 = vld [vmem:[%s0 + $0x18] sm:$0xff]
    %v71 = vld [vmem:[%s0 + $0x20] sm:$0xff]
    %v72 = vld [vmem:[%s0 + $0x28] sm:$0xff]
    %v73 = vld [vmem:[%s0 + $0x30] sm:$0xff]
    %v74 = vld [vmem:[%s0 + $0x38] sm:$0xff]
    %v75 = vld [vmem:[%s0 + $0x40] sm:$0xff]
    %v76 = vld [vmem:[%s0 + $0x48] sm:$0xff]
    %v77 = vld [vmem:[%s0 + $0x50] sm:$0xff]
    %v78 = vld [vmem:[%s0 + $0x58] sm:$0xff]
    %v79 = vld [vmem:[%s0 + $0x60] sm:$0xff]
    %v80 = vld [vmem:[%s0 + $0x68] sm:$0xff]
    %v81 = vld [vmem:[%s0 + $0x70] sm:$0xff]
    %v82 = vld [vmem:[%s0 + $0x78] sm:$0xff]
    %v83 = vld [vmem:[#allocation5] sm:$0xff]
    %v84 = vld [vmem:[#allocation5 + $0x8] sm:$0xff]
    %v85 = vld [vmem:[#allocation5 + $0x10] sm:$0xff]
    %v86 = vld [vmem:[#allocation5 + $0x18] sm:$0xff]
    %v87 = vld [vmem:[#allocation5 + $0x20] sm:$0xff]
    %v88 = vld [vmem:[#allocation5 + $0x28] sm:$0xff]
    %v89 = vld [vmem:[#allocation5 + $0x30] sm:$0xff]
    %v90 = vld [vmem:[#allocation5 + $0x38] sm:$0xff]
    %v91 = vld [vmem:[#allocation5 + $0x40] sm:$0xff]
    %v92 = vld [vmem:[%s0 + $0x80] sm:$0xff]
    %s93 = scalar_lea.vmem [#allocation5], 72
    %v94 = vld [vmem:[%s93] sm:$0xff]
    %v95 = vld [vmem:[%s93 + $0x8] sm:$0xff]
    %v96 = vld [vmem:[%s93 + $0x10] sm:$0xff]
    %v97 = vld [vmem:[%s93 + $0x18] sm:$0xff]
    %v98 = vld [vmem:[%s93 + $0x20] sm:$0xff]
    %v99 = vld [vmem:[%s93 + $0x28] sm:$0xff]
    %v100 = vld [vmem:[%s93 + $0x30] sm:$0xff]
    %v101 = vld [vmem:[%s93 + $0x38] sm:$0xff]
    %v102 = vld [vmem:[%s93 + $0x40] sm:$0xff]
    %vm103 = vcmask 588800
    %v105 = vsel %vm103, %v68, 0
    %v108 = vsel %vm103, %v69, 0
    %v111 = vsel %vm103, %v70, 0
    %v114 = vsel %vm103, %v71, 0
    %v117 = vsel %vm103, %v72, 0
    %v120 = vsel %vm103, %v73, 0
    %v123 = vsel %vm103, %v74, 0
    %v126 = vsel %vm103, %v75, 0
    %v129 = vsel %vm103, %v76, 0
    %v132 = vsel %vm103, %v77, 0
    %v135 = vsel %vm103, %v78, 0
    %v138 = vsel %vm103, %v79, 0
    %v141 = vsel %vm103, %v80, 0
    %v144 = vsel %vm103, %v81, 0
    %v147 = vsel %vm103, %v82, 0
    %v150 = vsel %vm103, %v92, 0
    %152 = vmatprep.subr.mxu0 0.0
    %153 = vmatpush1.msra.mxu0 0.0
    %154 = vmatprep.subr.mxu0 0.0
    %155 = vmatpush1.msra.mxu0 0.0
    %156 = vmatprep.subr.mxu0 0.0
    %157 = vmatpush1.msra.mxu0 0.0
    %158 = vmatprep.subr.mxu0 0.0
    %159 = vmatpush1.msra.mxu0 0.0
    %160 = vmatprep.subr.mxu0 0.0
    %161 = vmatpush1.msra.mxu0 0.0
    %162 = vmatprep.subr.mxu0 0.0
    %163 = vmatpush1.msra.mxu0 0.0
    %164 = vmatprep.subr.mxu0 0.0
    %165 = vmatpush1.msra.mxu0 0.0
    %166 = vmatprep.subr.mxu0 0.0
    %167 = vmatpush1.msra.mxu0 %v102
    %168 = vmatprep.subr.mxu0 0.0
    %169 = vmatpush1.msra.mxu0 %v101
    %170 = vmatprep.subr.mxu0 0.0
    %171 = vmatpush1.msra.mxu0 %v100
    %172 = vmatprep.subr.mxu0 0.0
    %173 = vmatpush1.msra.mxu0 %v99
    %174 = vmatprep.subr.mxu0 0.0
    %175 = vmatpush1.msra.mxu0 %v98
    %176 = vmatprep.subr.mxu0 0.0
    %177 = vmatpush1.msra.mxu0 %v97
    %178 = vmatprep.subr.mxu0 0.0
    %179 = vmatpush1.msra.mxu0 %v96
    %180 = vmatprep.subr.mxu0 0.0
    %181 = vmatpush1.msra.mxu0 %v95
    %182 = vmatprep.subr.mxu0 0.0
    %183 = vmatpush1.msra.mxu0 %v94
    %184 = vmatprep.subr.mxu0 0.0
    %185 = vmatpush2.msra.mxu0 0.0
    %186 = vmatprep.subr.mxu0 0.0
    %187 = vmatpush2.msra.mxu0 0.0
    %188 = vmatprep.subr.mxu0 0.0
    %189 = vmatpush2.msra.mxu0 0.0
    %190 = vmatprep.subr.mxu0 0.0
    %191 = vmatpush2.msra.mxu0 0.0
    %192 = vmatprep.subr.mxu0 0.0
    %193 = vmatpush2.msra.mxu0 0.0
    %194 = vmatprep.subr.mxu0 0.0
    %195 = vmatpush2.msra.mxu0 0.0
    %196 = vmatprep.subr.mxu0 0.0
    %197 = vmatpush2.msra.mxu0 0.0
    %198 = vmatprep.subr.mxu0 0.0
    %199 = vmatpush2.msra.mxu0 0.0
    %200 = vmatprep.subr.mxu0 0.0
    %201 = vmatpush2.msra.mxu0 0.0
    %202 = vmatprep.subr.mxu0 0.0
    %203 = vmatpush2.msra.mxu0 0.0
    %204 = vmatprep.subr.mxu0 0.0
    %205 = vmatpush2.msra.mxu0 0.0
    %206 = vmatprep.subr.mxu0 0.0
    %207 = vmatpush2.msra.mxu0 0.0
    %208 = vmatprep.subr.mxu0 0.0
    %209 = vmatpush2.msra.mxu0 0.0
    %210 = vmatprep.subr.mxu0 0.0
    %211 = vmatpush2.msra.mxu0 0.0
    %212 = vmatprep.subr.mxu0 0.0
    %213 = vmatpush2.msra.mxu0 0.0
    %214 = vmatprep.subr.mxu0 0.0
    %215 = vmatpush2.msra.mxu0 0.0
    %216 = vmatprep.mubr.f32.mxu0 0.0
    %217 = vmatmul.mubr.f32.gmra.mxu0 %v105
    %v218 = vpop.f32.mrf.mxu0
    %v219 = vadd.f32 0.0, %v218
    %v220 = vpop.f32.mrf.mxu0
    %221 = vmatprep.mubr.f32.mxu0 0.0
    %222 = vmatmul.mubr.f32.gmra.mxu0 %v108
    %v223 = vpop.f32.mrf.mxu0
    %v224 = vadd.f32 0.0, %v223
    %v225 = vpop.f32.mrf.mxu0
    %226 = vmatprep.mubr.f32.mxu0 0.0
    %227 = vmatmul.mubr.f32.gmra.mxu0 %v111
    %v228 = vpop.f32.mrf.mxu0
    %v229 = vadd.f32 0.0, %v228
    %v230 = vpop.f32.mrf.mxu0
    %231 = vmatprep.mubr.f32.mxu0 0.0
    %232 = vmatmul.mubr.f32.gmra.mxu0 %v114
    %v233 = vpop.f32.mrf.mxu0
    %v234 = vadd.f32 0.0, %v233
    %v235 = vpop.f32.mrf.mxu0
    %236 = vmatprep.mubr.f32.mxu0 0.0
    %237 = vmatmul.mubr.f32.gmra.mxu0 %v117
    %v238 = vpop.f32.mrf.mxu0
    %v239 = vadd.f32 0.0, %v238
    %v240 = vpop.f32.mrf.mxu0
    %241 = vmatprep.mubr.f32.mxu0 0.0
    %242 = vmatmul.mubr.f32.gmra.mxu0 %v120
    %v243 = vpop.f32.mrf.mxu0
    %v244 = vadd.f32 0.0, %v243
    %v245 = vpop.f32.mrf.mxu0
    %246 = vmatprep.mubr.f32.mxu0 0.0
    %247 = vmatmul.mubr.f32.gmra.mxu0 %v123
    %v248 = vpop.f32.mrf.mxu0
    %v249 = vadd.f32 0.0, %v248
    %v250 = vpop.f32.mrf.mxu0
    %251 = vmatprep.mubr.f32.mxu0 0.0
    %252 = vmatmul.mubr.f32.gmra.mxu0 %v126
    %v253 = vpop.f32.mrf.mxu0
    %v254 = vadd.f32 0.0, %v253
    %v255 = vpop.f32.mrf.mxu0
    %256 = vmatprep.mubr.f32.mxu0 0.0
    %257 = vmatmul.mubr.f32.gmra.mxu0 %v129
    %v258 = vpop.f32.mrf.mxu0
    %v259 = vadd.f32 0.0, %v258
    %v260 = vpop.f32.mrf.mxu0
    %261 = vmatprep.mubr.f32.mxu0 0.0
    %262 = vmatmul.mubr.f32.gmra.mxu0 %v132
    %v263 = vpop.f32.mrf.mxu0
    %v264 = vadd.f32 0.0, %v263
    %v265 = vpop.f32.mrf.mxu0
    %266 = vmatprep.mubr.f32.mxu0 0.0
    %267 = vmatmul.mubr.f32.gmra.mxu0 %v135
    %v268 = vpop.f32.mrf.mxu0
    %v269 = vadd.f32 0.0, %v268
    %v270 = vpop.f32.mrf.mxu0
    %271 = vmatprep.mubr.f32.mxu0 0.0
    %272 = vmatmul.mubr.f32.gmra.mxu0 %v138
    %v273 = vpop.f32.mrf.mxu0
    %v274 = vadd.f32 0.0, %v273
    %v275 = vpop.f32.mrf.mxu0
    %276 = vmatprep.mubr.f32.mxu0 0.0
    %277 = vmatmul.mubr.f32.gmra.mxu0 %v141
    %v278 = vpop.f32.mrf.mxu0
    %v279 = vadd.f32 0.0, %v278
    %v280 = vpop.f32.mrf.mxu0
    %281 = vmatprep.mubr.f32.mxu0 0.0
    %282 = vmatmul.mubr.f32.gmra.mxu0 %v144
    %v283 = vpop.f32.mrf.mxu0
    %v284 = vadd.f32 0.0, %v283
    %v285 = vpop.f32.mrf.mxu0
    %286 = vmatprep.mubr.f32.mxu0 0.0
    %287 = vmatmul.mubr.f32.gmra.mxu0 %v147
    %v288 = vpop.f32.mrf.mxu0
    %v289 = vadd.f32 0.0, %v288
    %v290 = vpop.f32.mrf.mxu0
    %291 = vmatprep.mubr.f32.mxu0 0.0
    %292 = vmatmul.mubr.f32.gmra.mxu0 %v150
    %v293 = vpop.f32.mrf.mxu0
    %v294 = vadd.f32 0.0, %v293
    %v295 = vpop.f32.mrf.mxu0
    %296 = vdwg.mxu0
    %v298 = vsel %vm103, %v67, 0
    %300 = vmatprep.subr.mxu0 0.0
    %301 = vmatpush1.msra.mxu0 0.0
    %302 = vmatprep.subr.mxu0 0.0
    %303 = vmatpush1.msra.mxu0 0.0
    %304 = vmatprep.subr.mxu0 0.0
    %305 = vmatpush1.msra.mxu0 0.0
    %306 = vmatprep.subr.mxu0 0.0
    %307 = vmatpush1.msra.mxu0 0.0
    %308 = vmatprep.subr.mxu0 0.0
    %309 = vmatpush1.msra.mxu0 0.0
    %310 = vmatprep.subr.mxu0 0.0
    %311 = vmatpush1.msra.mxu0 0.0
    %312 = vmatprep.subr.mxu0 0.0
    %313 = vmatpush1.msra.mxu0 0.0
    %314 = vmatprep.subr.mxu0 0.0
    %315 = vmatpush1.msra.mxu0 %v91
    %316 = vmatprep.subr.mxu0 0.0
    %317 = vmatpush1.msra.mxu0 %v90
    %318 = vmatprep.subr.mxu0 0.0
    %319 = vmatpush1.msra.mxu0 %v89
    %320 = vmatprep.subr.mxu0 0.0
    %321 = vmatpush1.msra.mxu0 %v88
    %322 = vmatprep.subr.mxu0 0.0
    %323 = vmatpush1.msra.mxu0 %v87
    %324 = vmatprep.subr.mxu0 0.0
    %325 = vmatpush1.msra.mxu0 %v86
    %326 = vmatprep.subr.mxu0 0.0
    %327 = vmatpush1.msra.mxu0 %v85
    %328 = vmatprep.subr.mxu0 0.0
    %329 = vmatpush1.msra.mxu0 %v84
    %330 = vmatprep.subr.mxu0 0.0
    %331 = vmatpush1.msra.mxu0 %v83
    %332 = vmatprep.subr.mxu0 0.0
    %333 = vmatpush2.msra.mxu0 0.0
    %334 = vmatprep.subr.mxu0 0.0
    %335 = vmatpush2.msra.mxu0 0.0
    %336 = vmatprep.subr.mxu0 0.0
    %337 = vmatpush2.msra.mxu0 0.0
    %338 = vmatprep.subr.mxu0 0.0
    %339 = vmatpush2.msra.mxu0 0.0
    %340 = vmatprep.subr.mxu0 0.0
    %341 = vmatpush2.msra.mxu0 0.0
    %342 = vmatprep.subr.mxu0 0.0
    %343 = vmatpush2.msra.mxu0 0.0
    %344 = vmatprep.subr.mxu0 0.0
    %345 = vmatpush2.msra.mxu0 0.0
    %346 = vmatprep.subr.mxu0 0.0
    %347 = vmatpush2.msra.mxu0 0.0
    %348 = vmatprep.subr.mxu0 0.0
    %349 = vmatpush2.msra.mxu0 0.0
    %350 = vmatprep.subr.mxu0 0.0
    %351 = vmatpush2.msra.mxu0 0.0
    %352 = vmatprep.subr.mxu0 0.0
    %353 = vmatpush2.msra.mxu0 0.0
    %354 = vmatprep.subr.mxu0 0.0
    %355 = vmatpush2.msra.mxu0 0.0
    %356 = vmatprep.subr.mxu0 0.0
    %357 = vmatpush2.msra.mxu0 0.0
    %358 = vmatprep.subr.mxu0 0.0
    %359 = vmatpush2.msra.mxu0 0.0
    %360 = vmatprep.subr.mxu0 0.0
    %361 = vmatpush2.msra.mxu0 0.0
    %362 = vmatprep.subr.mxu0 0.0
    %363 = vmatpush2.msra.mxu0 0.0
    %364 = vmatprep.mubr.f32.mxu0 0.0
    %365 = vmatmul.mubr.f32.gmra.mxu0 %v298
    %v366 = vpop.f32.mrf.mxu0
    %v367 = vadd.f32 %v219, %v366
    %v368 = vpop.f32.mrf.mxu0
    %369 = vmatprep.mubr.f32.mxu0 0.0
    %370 = vmatmul.mubr.f32.gmra.mxu0 %v105
    %v371 = vpop.f32.mrf.mxu0
    %v372 = vadd.f32 %v224, %v371
    %v373 = vpop.f32.mrf.mxu0
    %374 = vmatprep.mubr.f32.mxu0 0.0
    %375 = vmatmul.mubr.f32.gmra.mxu0 %v108
    %v376 = vpop.f32.mrf.mxu0
    %v377 = vadd.f32 %v229, %v376
    %v378 = vpop.f32.mrf.mxu0
    %379 = vmatprep.mubr.f32.mxu0 0.0
    %380 = vmatmul.mubr.f32.gmra.mxu0 %v111
    %v381 = vpop.f32.mrf.mxu0
    %v382 = vadd.f32 %v234, %v381
    %v383 = vpop.f32.mrf.mxu0
    %384 = vmatprep.mubr.f32.mxu0 0.0
    %385 = vmatmul.mubr.f32.gmra.mxu0 %v114
    %v386 = vpop.f32.mrf.mxu0
    %v387 = vadd.f32 %v239, %v386
    %v388 = vpop.f32.mrf.mxu0
    %389 = vmatprep.mubr.f32.mxu0 0.0
    %390 = vmatmul.mubr.f32.gmra.mxu0 %v117
    %v391 = vpop.f32.mrf.mxu0
    %v392 = vadd.f32 %v244, %v391
    %v393 = vpop.f32.mrf.mxu0
    %394 = vmatprep.mubr.f32.mxu0 0.0
    %395 = vmatmul.mubr.f32.gmra.mxu0 %v120
    %v396 = vpop.f32.mrf.mxu0
    %v397 = vadd.f32 %v249, %v396
    %v398 = vpop.f32.mrf.mxu0
    %399 = vmatprep.mubr.f32.mxu0 0.0
    %400 = vmatmul.mubr.f32.gmra.mxu0 %v123
    %v401 = vpop.f32.mrf.mxu0
    %v402 = vadd.f32 %v254, %v401
    %v403 = vpop.f32.mrf.mxu0
    %404 = vmatprep.mubr.f32.mxu0 0.0
    %405 = vmatmul.mubr.f32.gmra.mxu0 %v126
    %v406 = vpop.f32.mrf.mxu0
    %v407 = vadd.f32 %v259, %v406
    %v408 = vpop.f32.mrf.mxu0
    %409 = vmatprep.mubr.f32.mxu0 0.0
    %410 = vmatmul.mubr.f32.gmra.mxu0 %v129
    %v411 = vpop.f32.mrf.mxu0
    %v412 = vadd.f32 %v264, %v411
    %v413 = vpop.f32.mrf.mxu0
    %414 = vmatprep.mubr.f32.mxu0 0.0
    %415 = vmatmul.mubr.f32.gmra.mxu0 %v132
    %v416 = vpop.f32.mrf.mxu0
    %v417 = vadd.f32 %v269, %v416
    %v418 = vpop.f32.mrf.mxu0
    %419 = vmatprep.mubr.f32.mxu0 0.0
    %420 = vmatmul.mubr.f32.gmra.mxu0 %v135
    %v421 = vpop.f32.mrf.mxu0
    %v422 = vadd.f32 %v274, %v421
    %v423 = vpop.f32.mrf.mxu0
    %424 = vmatprep.mubr.f32.mxu0 0.0
    %425 = vmatmul.mubr.f32.gmra.mxu0 %v138
    %v426 = vpop.f32.mrf.mxu0
    %v427 = vadd.f32 %v279, %v426
    %v428 = vpop.f32.mrf.mxu0
    %429 = vmatprep.mubr.f32.mxu0 0.0
    %430 = vmatmul.mubr.f32.gmra.mxu0 %v141
    %v431 = vpop.f32.mrf.mxu0
    %v432 = vadd.f32 %v284, %v431
    %v433 = vpop.f32.mrf.mxu0
    %434 = vmatprep.mubr.f32.mxu0 0.0
    %435 = vmatmul.mubr.f32.gmra.mxu0 %v144
    %v436 = vpop.f32.mrf.mxu0
    %v437 = vadd.f32 %v289, %v436
    %v438 = vpop.f32.mrf.mxu0
    %439 = vmatprep.mubr.f32.mxu0 0.0
    %440 = vmatmul.mubr.f32.gmra.mxu0 %v147
    %v441 = vpop.f32.mrf.mxu0
    %v442 = vadd.f32 %v294, %v441
    %v443 = vpop.f32.mrf.mxu0
    %444 = vdwg.mxu0
    %v445 = vld [vmem:[%s0 + $0x10] sm:$0xff]
    %v446 = vld [vmem:[%s0 + $0x18] sm:$0xff]
    %v447 = vld [vmem:[%s0 + $0x20] sm:$0xff]
    %v448 = vld [vmem:[%s0 + $0x28] sm:$0xff]
    %v449 = vld [vmem:[%s0 + $0x30] sm:$0xff]
    %v450 = vld [vmem:[%s0 + $0x38] sm:$0xff]
    %v451 = vld [vmem:[%s0 + $0x40] sm:$0xff]
    %v452 = vld [vmem:[%s0 + $0x48] sm:$0xff]
    %v453 = vld [vmem:[%s0 + $0x50] sm:$0xff]
    %v454 = vld [vmem:[%s0 + $0x58] sm:$0xff]
    %v455 = vld [vmem:[%s0 + $0x60] sm:$0xff]
    %v456 = vld [vmem:[%s0 + $0x68] sm:$0xff]
    %v457 = vld [vmem:[%s0 + $0x70] sm:$0xff]
    %v458 = vld [vmem:[%s0 + $0x78] sm:$0xff]
    %v459 = vld [vmem:[%s0 + $0x80] sm:$0xff]
    %v460 = vld [vmem:[%s0 + $0x88] sm:$0xff]
    %s461 = scalar_lea.vmem [#allocation5], 144
    %v462 = vld [vmem:[%s461] sm:$0xff]
    %v463 = vld [vmem:[%s461 + $0x8] sm:$0xff]
    %v464 = vld [vmem:[%s461 + $0x10] sm:$0xff]
    %v465 = vld [vmem:[%s461 + $0x18] sm:$0xff]
    %v466 = vld [vmem:[%s461 + $0x20] sm:$0xff]
    %v467 = vld [vmem:[%s461 + $0x28] sm:$0xff]
    %v468 = vld [vmem:[%s461 + $0x30] sm:$0xff]
    %v469 = vld [vmem:[%s461 + $0x38] sm:$0xff]
    %v470 = vld [vmem:[%s461 + $0x40] sm:$0xff]
    %v472 = vsel %vm103, %v445, 0
    %v475 = vsel %vm103, %v446, 0
    %v478 = vsel %vm103, %v447, 0
    %v481 = vsel %vm103, %v448, 0
    %v484 = vsel %vm103, %v449, 0
    %v487 = vsel %vm103, %v450, 0
    %v490 = vsel %vm103, %v451, 0
    %v493 = vsel %vm103, %v452, 0
    %v496 = vsel %vm103, %v453, 0
    %v499 = vsel %vm103, %v454, 0
    %v502 = vsel %vm103, %v455, 0
    %v505 = vsel %vm103, %v456, 0
    %v508 = vsel %vm103, %v457, 0
    %v511 = vsel %vm103, %v458, 0
    %v514 = vsel %vm103, %v459, 0
    %v517 = vsel %vm103, %v460, 0
    %519 = vmatprep.subr.mxu0 0.0
    %520 = vmatpush1.msra.mxu0 0.0
    %521 = vmatprep.subr.mxu0 0.0
    %522 = vmatpush1.msra.mxu0 0.0
    %523 = vmatprep.subr.mxu0 0.0
    %524 = vmatpush1.msra.mxu0 0.0
    %525 = vmatprep.subr.mxu0 0.0
    %526 = vmatpush1.msra.mxu0 0.0
    %527 = vmatprep.subr.mxu0 0.0
    %528 = vmatpush1.msra.mxu0 0.0
    %529 = vmatprep.subr.mxu0 0.0
    %530 = vmatpush1.msra.mxu0 0.0
    %531 = vmatprep.subr.mxu0 0.0
    %532 = vmatpush1.msra.mxu0 0.0
    %533 = vmatprep.subr.mxu0 0.0
    %534 = vmatpush1.msra.mxu0 %v470
    %535 = vmatprep.subr.mxu0 0.0
    %536 = vmatpush1.msra.mxu0 %v469
    %537 = vmatprep.subr.mxu0 0.0
    %538 = vmatpush1.msra.mxu0 %v468
    %539 = vmatprep.subr.mxu0 0.0
    %540 = vmatpush1.msra.mxu0 %v467
    %541 = vmatprep.subr.mxu0 0.0
    %542 = vmatpush1.msra.mxu0 %v466
    %543 = vmatprep.subr.mxu0 0.0
    %544 = vmatpush1.msra.mxu0 %v465
    %545 = vmatprep.subr.mxu0 0.0
    %546 = vmatpush1.msra.mxu0 %v464
    %547 = vmatprep.subr.mxu0 0.0
    %548 = vmatpush1.msra.mxu0 %v463
    %549 = vmatprep.subr.mxu0 0.0
    %550 = vmatpush1.msra.mxu0 %v462
    %551 = vmatprep.subr.mxu0 0.0
    %552 = vmatpush2.msra.mxu0 0.0
    %553 = vmatprep.subr.mxu0 0.0
    %554 = vmatpush2.msra.mxu0 0.0
    %555 = vmatprep.subr.mxu0 0.0
    %556 = vmatpush2.msra.mxu0 0.0
    %557 = vmatprep.subr.mxu0 0.0
    %558 = vmatpush2.msra.mxu0 0.0
    %559 = vmatprep.subr.mxu0 0.0
    %560 = vmatpush2.msra.mxu0 0.0
    %561 = vmatprep.subr.mxu0 0.0
    %562 = vmatpush2.msra.mxu0 0.0
    %563 = vmatprep.subr.mxu0 0.0
    %564 = vmatpush2.msra.mxu0 0.0
    %565 = vmatprep.subr.mxu0 0.0
    %566 = vmatpush2.msra.mxu0 0.0
    %567 = vmatprep.subr.mxu0 0.0
    %568 = vmatpush2.msra.mxu0 0.0
    %569 = vmatprep.subr.mxu0 0.0
    %570 = vmatpush2.msra.mxu0 0.0
    %571 = vmatprep.subr.mxu0 0.0
    %572 = vmatpush2.msra.mxu0 0.0
    %573 = vmatprep.subr.mxu0 0.0
    %574 = vmatpush2.msra.mxu0 0.0
    %575 = vmatprep.subr.mxu0 0.0
    %576 = vmatpush2.msra.mxu0 0.0
    %577 = vmatprep.subr.mxu0 0.0
    %578 = vmatpush2.msra.mxu0 0.0
    %579 = vmatprep.subr.mxu0 0.0
    %580 = vmatpush2.msra.mxu0 0.0
    %581 = vmatprep.subr.mxu0 0.0
    %582 = vmatpush2.msra.mxu0 0.0
    %583 = vmatprep.mubr.f32.mxu0 0.0
    %584 = vmatmul.mubr.f32.gmra.mxu0 %v472
    %v585 = vpop.f32.mrf.mxu0
    %v586 = vadd.f32 0.0, %v585
    %v587 = vpop.f32.mrf.mxu0
    %588 = vmatprep.mubr.f32.mxu0 0.0
    %589 = vmatmul.mubr.f32.gmra.mxu0 %v475
    %v590 = vpop.f32.mrf.mxu0
    %v591 = vadd.f32 0.0, %v590
    %v592 = vpop.f32.mrf.mxu0
    %593 = vmatprep.mubr.f32.mxu0 0.0
    %594 = vmatmul.mubr.f32.gmra.mxu0 %v478
    %v595 = vpop.f32.mrf.mxu0
    %v596 = vadd.f32 0.0, %v595
    %v597 = vpop.f32.mrf.mxu0
    %598 = vmatprep.mubr.f32.mxu0 0.0
    %599 = vmatmul.mubr.f32.gmra.mxu0 %v481
    %v600 = vpop.f32.mrf.mxu0
    %v601 = vadd.f32 0.0, %v600
    %v602 = vpop.f32.mrf.mxu0
    %603 = vmatprep.mubr.f32.mxu0 0.0
    %604 = vmatmul.mubr.f32.gmra.mxu0 %v484
    %v605 = vpop.f32.mrf.mxu0
    %v606 = vadd.f32 0.0, %v605
    %v607 = vpop.f32.mrf.mxu0
    %608 = vmatprep.mubr.f32.mxu0 0.0
    %609 = vmatmul.mubr.f32.gmra.mxu0 %v487
    %v610 = vpop.f32.mrf.mxu0
    %v611 = vadd.f32 0.0, %v610
    %v612 = vpop.f32.mrf.mxu0
    %613 = vmatprep.mubr.f32.mxu0 0.0
    %614 = vmatmul.mubr.f32.gmra.mxu0 %v490
    %v615 = vpop.f32.mrf.mxu0
    %v616 = vadd.f32 0.0, %v615
    %v617 = vpop.f32.mrf.mxu0
    %618 = vmatprep.mubr.f32.mxu0 0.0
    %619 = vmatmul.mubr.f32.gmra.mxu0 %v493
    %v620 = vpop.f32.mrf.mxu0
    %v621 = vadd.f32 0.0, %v620
    %v622 = vpop.f32.mrf.mxu0
    %623 = vmatprep.mubr.f32.mxu0 0.0
    %624 = vmatmul.mubr.f32.gmra.mxu0 %v496
    %v625 = vpop.f32.mrf.mxu0
    %v626 = vadd.f32 0.0, %v625
    %v627 = vpop.f32.mrf.mxu0
    %628 = vmatprep.mubr.f32.mxu0 0.0
    %629 = vmatmul.mubr.f32.gmra.mxu0 %v499
    %v630 = vpop.f32.mrf.mxu0
    %v631 = vadd.f32 0.0, %v630
    %v632 = vpop.f32.mrf.mxu0
    %633 = vmatprep.mubr.f32.mxu0 0.0
    %634 = vmatmul.mubr.f32.gmra.mxu0 %v502
    %v635 = vpop.f32.mrf.mxu0
    %v636 = vadd.f32 0.0, %v635
    %v637 = vpop.f32.mrf.mxu0
    %638 = vmatprep.mubr.f32.mxu0 0.0
    %639 = vmatmul.mubr.f32.gmra.mxu0 %v505
    %v640 = vpop.f32.mrf.mxu0
    %v641 = vadd.f32 0.0, %v640
    %v642 = vpop.f32.mrf.mxu0
    %643 = vmatprep.mubr.f32.mxu0 0.0
    %644 = vmatmul.mubr.f32.gmra.mxu0 %v508
    %v645 = vpop.f32.mrf.mxu0
    %v646 = vadd.f32 0.0, %v645
    %v647 = vpop.f32.mrf.mxu0
    %648 = vmatprep.mubr.f32.mxu0 0.0
    %649 = vmatmul.mubr.f32.gmra.mxu0 %v511
    %v650 = vpop.f32.mrf.mxu0
    %v651 = vadd.f32 0.0, %v650
    %v652 = vpop.f32.mrf.mxu0
    %653 = vmatprep.mubr.f32.mxu0 0.0
    %654 = vmatmul.mubr.f32.gmra.mxu0 %v514
    %v655 = vpop.f32.mrf.mxu0
    %v656 = vadd.f32 0.0, %v655
    %v657 = vpop.f32.mrf.mxu0
    %658 = vmatprep.mubr.f32.mxu0 0.0
    %659 = vmatmul.mubr.f32.gmra.mxu0 %v517
    %v660 = vpop.f32.mrf.mxu0
    %v661 = vadd.f32 0.0, %v660
    %v662 = vpop.f32.mrf.mxu0
    %663 = vdwg.mxu0
    %v664 = vadd.f32 %v367, %v586
    %v665 = vadd.f32 %v372, %v591
    %v666 = vadd.f32 %v377, %v596
    %v667 = vadd.f32 %v382, %v601
    %v668 = vadd.f32 %v387, %v606
    %v669 = vadd.f32 %v392, %v611
    %v670 = vadd.f32 %v397, %v616
    %v671 = vadd.f32 %v402, %v621
    %v672 = vadd.f32 %v407, %v626
    %v673 = vadd.f32 %v412, %v631
    %v674 = vadd.f32 %v417, %v636
    %v675 = vadd.f32 %v422, %v641
    %v676 = vadd.f32 %v427, %v646
    %v677 = vadd.f32 %v432, %v651
    %v678 = vadd.f32 %v437, %v656
    %v679 = vadd.f32 %v442, %v661
    %v680 = vld [vmem:[%s2] sm:$0x1]
    %v682 = vlaneseq
    %v683 = vshrl.u32 %v682, 7
    %v684 = vsub.s32 0, %v683
    %v685 = vrot.slane %v680, %v684
    %v687 = vadd.f32 %v664, %v685
    %v688 = vadd.f32 %v665, %v685
    %v689 = vadd.f32 %v666, %v685
    %v690 = vadd.f32 %v667, %v685
    %v691 = vadd.f32 %v668, %v685
    %v692 = vadd.f32 %v669, %v685
    %v693 = vadd.f32 %v670, %v685
    %v694 = vadd.f32 %v671, %v685
    %v695 = vadd.f32 %v672, %v685
    %v696 = vadd.f32 %v673, %v685
    %v697 = vadd.f32 %v674, %v685
    %v698 = vadd.f32 %v675, %v685
    %v699 = vadd.f32 %v676, %v685
    %v700 = vadd.f32 %v677, %v685
    %v701 = vadd.f32 %v678, %v685
    %v702 = vadd.f32 %v679, %v685
    %v703 = vmax.f32 %v687, 0.0
    %v704 = vmax.f32 %v688, 0.0
    %v705 = vmax.f32 %v689, 0.0
    %v706 = vmax.f32 %v690, 0.0
    %v707 = vmax.f32 %v691, 0.0
    %v708 = vmax.f32 %v692, 0.0
    %v709 = vmax.f32 %v693, 0.0
    %v710 = vmax.f32 %v694, 0.0
    %v711 = vmax.f32 %v695, 0.0
    %v712 = vmax.f32 %v696, 0.0
    %v713 = vmax.f32 %v697, 0.0
    %v714 = vmax.f32 %v698, 0.0
    %v715 = vmax.f32 %v699, 0.0
    %v716 = vmax.f32 %v700, 0.0
    %v717 = vmax.f32 %v701, 0.0
    %v718 = vmax.f32 %v702, 0.0
    %719 = vst [vmem:[#allocation2] sm:$0xff] %v703
    %720 = vst [vmem:[#allocation2 + $0x8] sm:$0xff] %v704
    %721 = vst [vmem:[#allocation2 + $0x10] sm:$0xff] %v705
    %722 = vst [vmem:[#allocation2 + $0x18] sm:$0xff] %v706
    %723 = vst [vmem:[#allocation2 + $0x20] sm:$0xff] %v707
    %724 = vst [vmem:[#allocation2 + $0x28] sm:$0xff] %v708
    %725 = vst [vmem:[#allocation2 + $0x30] sm:$0xff] %v709
    %726 = vst [vmem:[#allocation2 + $0x38] sm:$0xff] %v710
    %727 = vst [vmem:[#allocation2 + $0x40] sm:$0xff] %v711
    %728 = vst [vmem:[#allocation2 + $0x48] sm:$0xff] %v712
    %729 = vst [vmem:[#allocation2 + $0x50] sm:$0xff] %v713
    %730 = vst [vmem:[#allocation2 + $0x58] sm:$0xff] %v714
    %731 = vst [vmem:[#allocation2 + $0x60] sm:$0xff] %v715
    %732 = vst [vmem:[#allocation2 + $0x68] sm:$0xff] %v716
    %733 = vst [vmem:[#allocation2 + $0x70] sm:$0xff] %v717
    %734 = vst [vmem:[#allocation2 + $0x78] sm:$0xff] %v718
    %v735 = vld [vmem:[#allocation2] sm:$0xff]
    %v736 = vld [vmem:[#allocation2 + $0x8] sm:$0xff]
    %v737 = vmax.f32 %v735, %v736
    %739 = vrot.lane.b32.xlu0 %v737, 64
    %v740 = vpop.permute.xlu0 %739
    %v742 = vmax.f32 %v737, %v740
    %vm743 = vcmask 523264
    %744 = vst.msk [vmem:[#allocation3 + $0x8] sm:$0xff] %vm743, %v742
    %v745 = vld [vmem:[#allocation2 + $0x10] sm:$0xff]
    %v746 = vld [vmem:[#allocation2 + $0x18] sm:$0xff]
    %v747 = vmax.f32 %v745, %v746
    %749 = vrot.lane.b32.xlu0 %v747, 64
    %v750 = vpop.permute.xlu0 %749
    %v752 = vmax.f32 %v747, %v750
    %753 = vst.msk [vmem:[#allocation3 + $0x10] sm:$0xff] %vm743, %v752
    %v754 = vld [vmem:[#allocation2 + $0x20] sm:$0xff]
    %v755 = vld [vmem:[#allocation2 + $0x28] sm:$0xff]
    %v756 = vmax.f32 %v754, %v755
    %758 = vrot.lane.b32.xlu0 %v756, 64
    %v759 = vpop.permute.xlu0 %758
    %v761 = vmax.f32 %v756, %v759
    %762 = vst.msk [vmem:[#allocation3 + $0x18] sm:$0xff] %vm743, %v761
    %v763 = vld [vmem:[#allocation2 + $0x30] sm:$0xff]
    %v764 = vld [vmem:[#allocation2 + $0x38] sm:$0xff]
    %v765 = vmax.f32 %v763, %v764
    %767 = vrot.lane.b32.xlu0 %v765, 64
    %v768 = vpop.permute.xlu0 %767
    %v770 = vmax.f32 %v765, %v768
    %771 = vst.msk [vmem:[#allocation3 + $0x20] sm:$0xff] %vm743, %v770
    %v772 = vld [vmem:[#allocation2 + $0x40] sm:$0xff]
    %v773 = vld [vmem:[#allocation2 + $0x48] sm:$0xff]
    %v774 = vmax.f32 %v772, %v773
    %776 = vrot.lane.b32.xlu0 %v774, 64
    %v777 = vpop.permute.xlu0 %776
    %v779 = vmax.f32 %v774, %v777
    %780 = vst.msk [vmem:[#allocation3 + $0x28] sm:$0xff] %vm743, %v779
    %v781 = vld [vmem:[#allocation2 + $0x50] sm:$0xff]
    %v782 = vld [vmem:[#allocation2 + $0x58] sm:$0xff]
    %v783 = vmax.f32 %v781, %v782
    %785 = vrot.lane.b32.xlu0 %v783, 64
    %v786 = vpop.permute.xlu0 %785
    %v788 = vmax.f32 %v783, %v786
    %789 = vst.msk [vmem:[#allocation3 + $0x30] sm:$0xff] %vm743, %v788
    %v790 = vld [vmem:[#allocation2 + $0x60] sm:$0xff]
    %v791 = vld [vmem:[#allocation2 + $0x68] sm:$0xff]
    %v792 = vmax.f32 %v790, %v791
    %794 = vrot.lane.b32.xlu0 %v792, 64
    %v795 = vpop.permute.xlu0 %794
    %v797 = vmax.f32 %v792, %v795
    %798 = vst.msk [vmem:[#allocation3 + $0x38] sm:$0xff] %vm743, %v797
    %v799 = vld [vmem:[#allocation2 + $0x70] sm:$0xff]
    %v800 = vld [vmem:[#allocation2 + $0x78] sm:$0xff]
    %v801 = vmax.f32 %v799, %v800
    %803 = vrot.lane.b32.xlu0 %v801, 64
    %v804 = vpop.permute.xlu0 %803
    %v806 = vmax.f32 %v801, %v804
    %807 = vst.msk [vmem:[#allocation3 + $0x40] sm:$0xff] %vm743, %v806
    %v808 = vld [vmem:[#allocation3] sm:$0xff]
    %v809 = vld [vmem:[#allocation3 + $0x8] sm:$0xff]
    %v810 = vld [vmem:[#allocation3 + $0x10] sm:$0xff]
    %v811 = vld [vmem:[#allocation3 + $0x18] sm:$0xff]
    %v812 = vld [vmem:[#allocation3 + $0x20] sm:$0xff]
    %v813 = vld [vmem:[#allocation3 + $0x28] sm:$0xff]
    %v814 = vld [vmem:[#allocation3 + $0x30] sm:$0xff]
    %v815 = vld [vmem:[#allocation3 + $0x38] sm:$0xff]
    %v816 = vld [vmem:[%s3] sm:$0xff]
    %v817 = vld [vmem:[%s3 + $0x8] sm:$0xff]
    %v818 = vld [vmem:[%s3 + $0x10] sm:$0xff]
    %v819 = vld [vmem:[%s3 + $0x18] sm:$0xff]
    %v820 = vld [vmem:[%s3 + $0x20] sm:$0xff]
    %v821 = vld [vmem:[%s3 + $0x28] sm:$0xff]
    %v822 = vld [vmem:[%s3 + $0x30] sm:$0xff]
    %v823 = vld [vmem:[%s3 + $0x38] sm:$0xff]
    %v824 = vld [vmem:[#allocation3 + $0x40] sm:$0xff]
    %s825 = scalar_lea.vmem %s3, 64
    %v826 = vld [vmem:[%s825] sm:$0xff]
    %v827 = vld [vmem:[%s825 + $0x8] sm:$0xff]
    %v828 = vld [vmem:[%s825 + $0x10] sm:$0xff]
    %v829 = vld [vmem:[%s825 + $0x18] sm:$0xff]
    %v830 = vld [vmem:[%s825 + $0x20] sm:$0xff]
    %v831 = vld [vmem:[%s825 + $0x28] sm:$0xff]
    %v832 = vld [vmem:[%s825 + $0x30] sm:$0xff]
    %v833 = vld [vmem:[%s825 + $0x38] sm:$0xff]
    %v835 = vsel %vm743, %v809, 0
    %v838 = vsel %vm743, %v810, 0
    %v841 = vsel %vm743, %v811, 0
    %v844 = vsel %vm743, %v812, 0
    %v847 = vsel %vm743, %v813, 0
    %v850 = vsel %vm743, %v814, 0
    %v853 = vsel %vm743, %v815, 0
    %v856 = vsel %vm743, %v824, 0
    %858 = vmatprep.subr.mxu0 0.0
    %859 = vmatpush1.msra.mxu0 0.0
    %860 = vmatprep.subr.mxu0 0.0
    %861 = vmatpush1.msra.mxu0 0.0
    %862 = vmatprep.subr.mxu0 0.0
    %863 = vmatpush1.msra.mxu0 0.0
    %864 = vmatprep.subr.mxu0 0.0
    %865 = vmatpush1.msra.mxu0 0.0
    %866 = vmatprep.subr.mxu0 0.0
    %867 = vmatpush1.msra.mxu0 0.0
    %868 = vmatprep.subr.mxu0 0.0
    %869 = vmatpush1.msra.mxu0 0.0
    %870 = vmatprep.subr.mxu0 0.0
    %871 = vmatpush1.msra.mxu0 0.0
    %872 = vmatprep.subr.mxu0 0.0
    %873 = vmatpush1.msra.mxu0 0.0
    %874 = vmatprep.subr.mxu0 0.0
    %875 = vmatpush1.msra.mxu0 %v833
    %876 = vmatprep.subr.mxu0 0.0
    %877 = vmatpush1.msra.mxu0 %v832
    %878 = vmatprep.subr.mxu0 0.0
    %879 = vmatpush1.msra.mxu0 %v831
    %880 = vmatprep.subr.mxu0 0.0
    %881 = vmatpush1.msra.mxu0 %v830
    %882 = vmatprep.subr.mxu0 0.0
    %883 = vmatpush1.msra.mxu0 %v829
    %884 = vmatprep.subr.mxu0 0.0
    %885 = vmatpush1.msra.mxu0 %v828
    %886 = vmatprep.subr.mxu0 0.0
    %887 = vmatpush1.msra.mxu0 %v827
    %888 = vmatprep.subr.mxu0 0.0
    %889 = vmatpush1.msra.mxu0 %v826
    %890 = vmatprep.subr.mxu0 0.0
    %891 = vmatpush2.msra.mxu0 0.0
    %892 = vmatprep.subr.mxu0 0.0
    %893 = vmatpush2.msra.mxu0 0.0
    %894 = vmatprep.subr.mxu0 0.0
    %895 = vmatpush2.msra.mxu0 0.0
    %896 = vmatprep.subr.mxu0 0.0
    %897 = vmatpush2.msra.mxu0 0.0
    %898 = vmatprep.subr.mxu0 0.0
    %899 = vmatpush2.msra.mxu0 0.0
    %900 = vmatprep.subr.mxu0 0.0
    %901 = vmatpush2.msra.mxu0 0.0
    %902 = vmatprep.subr.mxu0 0.0
    %903 = vmatpush2.msra.mxu0 0.0
    %904 = vmatprep.subr.mxu0 0.0
    %905 = vmatpush2.msra.mxu0 0.0
    %906 = vmatprep.subr.mxu0 0.0
    %907 = vmatpush2.msra.mxu0 0.0
    %908 = vmatprep.subr.mxu0 0.0
    %909 = vmatpush2.msra.mxu0 0.0
    %910 = vmatprep.subr.mxu0 0.0
    %911 = vmatpush2.msra.mxu0 0.0
    %912 = vmatprep.subr.mxu0 0.0
    %913 = vmatpush2.msra.mxu0 0.0
    %914 = vmatprep.subr.mxu0 0.0
    %915 = vmatpush2.msra.mxu0 0.0
    %916 = vmatprep.subr.mxu0 0.0
    %917 = vmatpush2.msra.mxu0 0.0
    %918 = vmatprep.subr.mxu0 0.0
    %919 = vmatpush2.msra.mxu0 0.0
    %920 = vmatprep.subr.mxu0 0.0
    %921 = vmatpush2.msra.mxu0 0.0
    %922 = vmatprep.mubr.f32.mxu0 0.0
    %923 = vmatmul.mubr.f32.gmra.mxu0 %v835
    %v924 = vpop.f32.mrf.mxu0
    %v925 = vadd.f32 0.0, %v924
    %v926 = vpop.f32.mrf.mxu0
    %927 = vmatprep.mubr.f32.mxu0 0.0
    %928 = vmatmul.mubr.f32.gmra.mxu0 %v838
    %v929 = vpop.f32.mrf.mxu0
    %v930 = vadd.f32 0.0, %v929
    %v931 = vpop.f32.mrf.mxu0
    %932 = vmatprep.mubr.f32.mxu0 0.0
    %933 = vmatmul.mubr.f32.gmra.mxu0 %v841
    %v934 = vpop.f32.mrf.mxu0
    %v935 = vadd.f32 0.0, %v934
    %v936 = vpop.f32.mrf.mxu0
    %937 = vmatprep.mubr.f32.mxu0 0.0
    %938 = vmatmul.mubr.f32.gmra.mxu0 %v844
    %v939 = vpop.f32.mrf.mxu0
    %v940 = vadd.f32 0.0, %v939
    %v941 = vpop.f32.mrf.mxu0
    %942 = vmatprep.mubr.f32.mxu0 0.0
    %943 = vmatmul.mubr.f32.gmra.mxu0 %v847
    %v944 = vpop.f32.mrf.mxu0
    %v945 = vadd.f32 0.0, %v944
    %v946 = vpop.f32.mrf.mxu0
    %947 = vmatprep.mubr.f32.mxu0 0.0
    %948 = vmatmul.mubr.f32.gmra.mxu0 %v850
    %v949 = vpop.f32.mrf.mxu0
    %v950 = vadd.f32 0.0, %v949
    %v951 = vpop.f32.mrf.mxu0
    %952 = vmatprep.mubr.f32.mxu0 0.0
    %953 = vmatmul.mubr.f32.gmra.mxu0 %v853
    %v954 = vpop.f32.mrf.mxu0
    %v955 = vadd.f32 0.0, %v954
    %v956 = vpop.f32.mrf.mxu0
    %957 = vmatprep.mubr.f32.mxu0 0.0
    %958 = vmatmul.mubr.f32.gmra.mxu0 %v856
    %v959 = vpop.f32.mrf.mxu0
    %v960 = vadd.f32 0.0, %v959
    %v961 = vpop.f32.mrf.mxu0
    %962 = vdwg.mxu0
    %v964 = vsel %vm743, %v808, 0
    %966 = vmatprep.subr.mxu0 0.0
    %967 = vmatpush1.msra.mxu0 0.0
    %968 = vmatprep.subr.mxu0 0.0
    %969 = vmatpush1.msra.mxu0 0.0
    %970 = vmatprep.subr.mxu0 0.0
    %971 = vmatpush1.msra.mxu0 0.0
    %972 = vmatprep.subr.mxu0 0.0
    %973 = vmatpush1.msra.mxu0 0.0
    %974 = vmatprep.subr.mxu0 0.0
    %975 = vmatpush1.msra.mxu0 0.0
    %976 = vmatprep.subr.mxu0 0.0
    %977 = vmatpush1.msra.mxu0 0.0
    %978 = vmatprep.subr.mxu0 0.0
    %979 = vmatpush1.msra.mxu0 0.0
    %980 = vmatprep.subr.mxu0 0.0
    %981 = vmatpush1.msra.mxu0 0.0
    %982 = vmatprep.subr.mxu0 0.0
    %983 = vmatpush1.msra.mxu0 %v823
    %984 = vmatprep.subr.mxu0 0.0
    %985 = vmatpush1.msra.mxu0 %v822
    %986 = vmatprep.subr.mxu0 0.0
    %987 = vmatpush1.msra.mxu0 %v821
    %988 = vmatprep.subr.mxu0 0.0
    %989 = vmatpush1.msra.mxu0 %v820
    %990 = vmatprep.subr.mxu0 0.0
    %991 = vmatpush1.msra.mxu0 %v819
    %992 = vmatprep.subr.mxu0 0.0
    %993 = vmatpush1.msra.mxu0 %v818
    %994 = vmatprep.subr.mxu0 0.0
    %995 = vmatpush1.msra.mxu0 %v817
    %996 = vmatprep.subr.mxu0 0.0
    %997 = vmatpush1.msra.mxu0 %v816
    %998 = vmatprep.subr.mxu0 0.0
    %999 = vmatpush2.msra.mxu0 0.0
    %1000 = vmatprep.subr.mxu0 0.0
    %1001 = vmatpush2.msra.mxu0 0.0
    %1002 = vmatprep.subr.mxu0 0.0
    %1003 = vmatpush2.msra.mxu0 0.0
    %1004 = vmatprep.subr.mxu0 0.0
    %1005 = vmatpush2.msra.mxu0 0.0
    %1006 = vmatprep.subr.mxu0 0.0
    %1007 = vmatpush2.msra.mxu0 0.0
    %1008 = vmatprep.subr.mxu0 0.0
    %1009 = vmatpush2.msra.mxu0 0.0
    %1010 = vmatprep.subr.mxu0 0.0
    %1011 = vmatpush2.msra.mxu0 0.0
    %1012 = vmatprep.subr.mxu0 0.0
    %1013 = vmatpush2.msra.mxu0 0.0
    %1014 = vmatprep.subr.mxu0 0.0
    %1015 = vmatpush2.msra.mxu0 0.0
    %1016 = vmatprep.subr.mxu0 0.0
    %1017 = vmatpush2.msra.mxu0 0.0
    %1018 = vmatprep.subr.mxu0 0.0
    %1019 = vmatpush2.msra.mxu0 0.0
    %1020 = vmatprep.subr.mxu0 0.0
    %1021 = vmatpush2.msra.mxu0 0.0
    %1022 = vmatprep.subr.mxu0 0.0
    %1023 = vmatpush2.msra.mxu0 0.0
    %1024 = vmatprep.subr.mxu0 0.0
    %1025 = vmatpush2.msra.mxu0 0.0
    %1026 = vmatprep.subr.mxu0 0.0
    %1027 = vmatpush2.msra.mxu0 0.0
    %1028 = vmatprep.subr.mxu0 0.0
    %1029 = vmatpush2.msra.mxu0 0.0
    %1030 = vmatprep.mubr.f32.mxu0 0.0
    %1031 = vmatmul.mubr.f32.gmra.mxu0 %v964
    %v1032 = vpop.f32.mrf.mxu0
    %v1033 = vadd.f32 %v925, %v1032
    %v1034 = vpop.f32.mrf.mxu0
    %1035 = vmatprep.mubr.f32.mxu0 0.0
    %1036 = vmatmul.mubr.f32.gmra.mxu0 %v835
    %v1037 = vpop.f32.mrf.mxu0
    %v1038 = vadd.f32 %v930, %v1037
    %v1039 = vpop.f32.mrf.mxu0
    %1040 = vmatprep.mubr.f32.mxu0 0.0
    %1041 = vmatmul.mubr.f32.gmra.mxu0 %v838
    %v1042 = vpop.f32.mrf.mxu0
    %v1043 = vadd.f32 %v935, %v1042
    %v1044 = vpop.f32.mrf.mxu0
    %1045 = vmatprep.mubr.f32.mxu0 0.0
    %1046 = vmatmul.mubr.f32.gmra.mxu0 %v841
    %v1047 = vpop.f32.mrf.mxu0
    %v1048 = vadd.f32 %v940, %v1047
    %v1049 = vpop.f32.mrf.mxu0
    %1050 = vmatprep.mubr.f32.mxu0 0.0
    %1051 = vmatmul.mubr.f32.gmra.mxu0 %v844
    %v1052 = vpop.f32.mrf.mxu0
    %v1053 = vadd.f32 %v945, %v1052
    %v1054 = vpop.f32.mrf.mxu0
    %1055 = vmatprep.mubr.f32.mxu0 0.0
    %1056 = vmatmul.mubr.f32.gmra.mxu0 %v847
    %v1057 = vpop.f32.mrf.mxu0
    %v1058 = vadd.f32 %v950, %v1057
    %v1059 = vpop.f32.mrf.mxu0
    %1060 = vmatprep.mubr.f32.mxu0 0.0
    %1061 = vmatmul.mubr.f32.gmra.mxu0 %v850
    %v1062 = vpop.f32.mrf.mxu0
    %v1063 = vadd.f32 %v955, %v1062
    %v1064 = vpop.f32.mrf.mxu0
    %1065 = vmatprep.mubr.f32.mxu0 0.0
    %1066 = vmatmul.mubr.f32.gmra.mxu0 %v853
    %v1067 = vpop.f32.mrf.mxu0
    %v1068 = vadd.f32 %v960, %v1067
    %v1069 = vpop.f32.mrf.mxu0
    %1070 = vdwg.mxu0
    %v1071 = vld [vmem:[#allocation3 + $0x10] sm:$0xff]
    %v1072 = vld [vmem:[#allocation3 + $0x18] sm:$0xff]
    %v1073 = vld [vmem:[#allocation3 + $0x20] sm:$0xff]
    %v1074 = vld [vmem:[#allocation3 + $0x28] sm:$0xff]
    %v1075 = vld [vmem:[#allocation3 + $0x30] sm:$0xff]
    %v1076 = vld [vmem:[#allocation3 + $0x38] sm:$0xff]
    %v1077 = vld [vmem:[#allocation3 + $0x40] sm:$0xff]
    %v1078 = vld [vmem:[#allocation3 + $0x48] sm:$0xff]
    %s1079 = scalar_lea.vmem %s3, 128
    %v1080 = vld [vmem:[%s1079] sm:$0xff]
    %v1081 = vld [vmem:[%s1079 + $0x8] sm:$0xff]
    %v1082 = vld [vmem:[%s1079 + $0x10] sm:$0xff]
    %v1083 = vld [vmem:[%s1079 + $0x18] sm:$0xff]
    %v1084 = vld [vmem:[%s1079 + $0x20] sm:$0xff]
    %v1085 = vld [vmem:[%s1079 + $0x28] sm:$0xff]
    %v1086 = vld [vmem:[%s1079 + $0x30] sm:$0xff]
    %v1087 = vld [vmem:[%s1079 + $0x38] sm:$0xff]
    %v1089 = vsel %vm743, %v1071, 0
    %v1092 = vsel %vm743, %v1072, 0
    %v1095 = vsel %vm743, %v1073, 0
    %v1098 = vsel %vm743, %v1074, 0
    %v1101 = vsel %vm743, %v1075, 0
    %v1104 = vsel %vm743, %v1076, 0
    %v1107 = vsel %vm743, %v1077, 0
    %v1110 = vsel %vm743, %v1078, 0
    %1112 = vmatprep.subr.mxu0 0.0
    %1113 = vmatpush1.msra.mxu0 0.0
    %1114 = vmatprep.subr.mxu0 0.0
    %1115 = vmatpush1.msra.mxu0 0.0
    %1116 = vmatprep.subr.mxu0 0.0
    %1117 = vmatpush1.msra.mxu0 0.0
    %1118 = vmatprep.subr.mxu0 0.0
    %1119 = vmatpush1.msra.mxu0 0.0
    %1120 = vmatprep.subr.mxu0 0.0
    %1121 = vmatpush1.msra.mxu0 0.0
    %1122 = vmatprep.subr.mxu0 0.0
    %1123 = vmatpush1.msra.mxu0 0.0
    %1124 = vmatprep.subr.mxu0 0.0
    %1125 = vmatpush1.msra.mxu0 0.0
    %1126 = vmatprep.subr.mxu0 0.0
    %1127 = vmatpush1.msra.mxu0 0.0
    %1128 = vmatprep.subr.mxu0 0.0
    %1129 = vmatpush1.msra.mxu0 %v1087
    %1130 = vmatprep.subr.mxu0 0.0
    %1131 = vmatpush1.msra.mxu0 %v1086
    %1132 = vmatprep.subr.mxu0 0.0
    %1133 = vmatpush1.msra.mxu0 %v1085
    %1134 = vmatprep.subr.mxu0 0.0
    %1135 = vmatpush1.msra.mxu0 %v1084
    %1136 = vmatprep.subr.mxu0 0.0
    %1137 = vmatpush1.msra.mxu0 %v1083
    %1138 = vmatprep.subr.mxu0 0.0
    %1139 = vmatpush1.msra.mxu0 %v1082
    %1140 = vmatprep.subr.mxu0 0.0
    %1141 = vmatpush1.msra.mxu0 %v1081
    %1142 = vmatprep.subr.mxu0 0.0
    %1143 = vmatpush1.msra.mxu0 %v1080
    %1144 = vmatprep.subr.mxu0 0.0
    %1145 = vmatpush2.msra.mxu0 0.0
    %1146 = vmatprep.subr.mxu0 0.0
    %1147 = vmatpush2.msra.mxu0 0.0
    %1148 = vmatprep.subr.mxu0 0.0
    %1149 = vmatpush2.msra.mxu0 0.0
    %1150 = vmatprep.subr.mxu0 0.0
    %1151 = vmatpush2.msra.mxu0 0.0
    %1152 = vmatprep.subr.mxu0 0.0
    %1153 = vmatpush2.msra.mxu0 0.0
    %1154 = vmatprep.subr.mxu0 0.0
    %1155 = vmatpush2.msra.mxu0 0.0
    %1156 = vmatprep.subr.mxu0 0.0
    %1157 = vmatpush2.msra.mxu0 0.0
    %1158 = vmatprep.subr.mxu0 0.0
    %1159 = vmatpush2.msra.mxu0 0.0
    %1160 = vmatprep.subr.mxu0 0.0
    %1161 = vmatpush2.msra.mxu0 0.0
    %1162 = vmatprep.subr.mxu0 0.0
    %1163 = vmatpush2.msra.mxu0 0.0
    %1164 = vmatprep.subr.mxu0 0.0
    %1165 = vmatpush2.msra.mxu0 0.0
    %1166 = vmatprep.subr.mxu0 0.0
    %1167 = vmatpush2.msra.mxu0 0.0
    %1168 = vmatprep.subr.mxu0 0.0
    %1169 = vmatpush2.msra.mxu0 0.0
    %1170 = vmatprep.subr.mxu0 0.0
    %1171 = vmatpush2.msra.mxu0 0.0
    %1172 = vmatprep.subr.mxu0 0.0
    %1173 = vmatpush2.msra.mxu0 0.0
    %1174 = vmatprep.subr.mxu0 0.0
    %1175 = vmatpush2.msra.mxu0 0.0
    %1176 = vmatprep.mubr.f32.mxu0 0.0
    %1177 = vmatmul.mubr.f32.gmra.mxu0 %v1089
    %v1178 = vpop.f32.mrf.mxu0
    %v1179 = vadd.f32 0.0, %v1178
    %v1180 = vpop.f32.mrf.mxu0
    %1181 = vmatprep.mubr.f32.mxu0 0.0
    %1182 = vmatmul.mubr.f32.gmra.mxu0 %v1092
    %v1183 = vpop.f32.mrf.mxu0
    %v1184 = vadd.f32 0.0, %v1183
    %v1185 = vpop.f32.mrf.mxu0
    %1186 = vmatprep.mubr.f32.mxu0 0.0
    %1187 = vmatmul.mubr.f32.gmra.mxu0 %v1095
    %v1188 = vpop.f32.mrf.mxu0
    %v1189 = vadd.f32 0.0, %v1188
    %v1190 = vpop.f32.mrf.mxu0
    %1191 = vmatprep.mubr.f32.mxu0 0.0
    %1192 = vmatmul.mubr.f32.gmra.mxu0 %v1098
    %v1193 = vpop.f32.mrf.mxu0
    %v1194 = vadd.f32 0.0, %v1193
    %v1195 = vpop.f32.mrf.mxu0
    %1196 = vmatprep.mubr.f32.mxu0 0.0
    %1197 = vmatmul.mubr.f32.gmra.mxu0 %v1101
    %v1198 = vpop.f32.mrf.mxu0
    %v1199 = vadd.f32 0.0, %v1198
    %v1200 = vpop.f32.mrf.mxu0
    %1201 = vmatprep.mubr.f32.mxu0 0.0
    %1202 = vmatmul.mubr.f32.gmra.mxu0 %v1104
    %v1203 = vpop.f32.mrf.mxu0
    %v1204 = vadd.f32 0.0, %v1203
    %v1205 = vpop.f32.mrf.mxu0
    %1206 = vmatprep.mubr.f32.mxu0 0.0
    %1207 = vmatmul.mubr.f32.gmra.mxu0 %v1107
    %v1208 = vpop.f32.mrf.mxu0
    %v1209 = vadd.f32 0.0, %v1208
    %v1210 = vpop.f32.mrf.mxu0
    %1211 = vmatprep.mubr.f32.mxu0 0.0
    %1212 = vmatmul.mubr.f32.gmra.mxu0 %v1110
    %v1213 = vpop.f32.mrf.mxu0
    %v1214 = vadd.f32 0.0, %v1213
    %v1215 = vpop.f32.mrf.mxu0
    %1216 = vdwg.mxu0
    %v1217 = vadd.f32 %v1033, %v1179
    %v1218 = vadd.f32 %v1038, %v1184
    %v1219 = vadd.f32 %v1043, %v1189
    %v1220 = vadd.f32 %v1048, %v1194
    %v1221 = vadd.f32 %v1053, %v1199
    %v1222 = vadd.f32 %v1058, %v1204
    %v1223 = vadd.f32 %v1063, %v1209
    %v1224 = vadd.f32 %v1068, %v1214
    %v1225 = vld [vmem:[%s4] sm:$0x1]
    %v1227 = vlaneseq
    %v1228 = vshrl.u32 %v1227, 7
    %v1229 = vsub.s32 0, %v1228
    %v1230 = vrot.slane %v1225, %v1229
    %v1232 = vadd.f32 %v1217, %v1230
    %v1233 = vadd.f32 %v1218, %v1230
    %v1234 = vadd.f32 %v1219, %v1230
    %v1235 = vadd.f32 %v1220, %v1230
    %v1236 = vadd.f32 %v1221, %v1230
    %v1237 = vadd.f32 %v1222, %v1230
    %v1238 = vadd.f32 %v1223, %v1230
    %v1239 = vadd.f32 %v1224, %v1230
    %v1240 = vmax.f32 %v1232, 0.0
    %v1241 = vmax.f32 %v1233, 0.0
    %v1242 = vmax.f32 %v1234, 0.0
    %v1243 = vmax.f32 %v1235, 0.0
    %v1244 = vmax.f32 %v1236, 0.0
    %v1245 = vmax.f32 %v1237, 0.0
    %v1246 = vmax.f32 %v1238, 0.0
    %v1247 = vmax.f32 %v1239, 0.0
    %1248 = vst [vmem:[#allocation4] sm:$0xff] %v1240
    %1249 = vst [vmem:[#allocation4 + $0x8] sm:$0xff] %v1241
    %1250 = vst [vmem:[#allocation4 + $0x10] sm:$0xff] %v1242
    %1251 = vst [vmem:[#allocation4 + $0x18] sm:$0xff] %v1243
    %1252 = vst [vmem:[#allocation4 + $0x20] sm:$0xff] %v1244
    %1253 = vst [vmem:[#allocation4 + $0x28] sm:$0xff] %v1245
    %1254 = vst [vmem:[#allocation4 + $0x30] sm:$0xff] %v1246
    %1255 = vst [vmem:[#allocation4 + $0x38] sm:$0xff] %v1247
    %v1256 = vld [vmem:[#allocation4] sm:$0xff]
    %v1257 = vld [vmem:[#allocation4 + $0x8] sm:$0xff]
    %v1258 = vmax.f32 %v1256, %v1257
    %1260 = vrot.lane.b32.xlu0 %v1258, 64
    %v1261 = vpop.permute.xlu0 %1260
    %v1263 = vmax.f32 %v1258, %v1261
    %v1264 = vld [vmem:[%s5] sm:$0xff]
    %v1265 = vld [vmem:[%s5 + $0x8] sm:$0xff]
    %v1266 = vld [vmem:[%s5 + $0x10] sm:$0xff]
    %v1267 = vld [vmem:[%s5 + $0x18] sm:$0xff]
    %v1268 = vld [vmem:[%s5 + $0x20] sm:$0xff]
    %v1269 = vld [vmem:[%s5 + $0x28] sm:$0xff]
    %v1270 = vld [vmem:[%s5 + $0x30] sm:$0xff]
    %v1271 = vld [vmem:[%s5 + $0x38] sm:$0xff]
    %v1272 = vld [vmem:[#allocation4 + $0x10] sm:$0xff]
    %v1273 = vld [vmem:[#allocation4 + $0x18] sm:$0xff]
    %v1274 = vmax.f32 %v1272, %v1273
    %1276 = vrot.lane.b32.xlu0 %v1274, 64
    %v1277 = vpop.permute.xlu0 %1276
    %v1279 = vmax.f32 %v1274, %v1277
    %s1280 = scalar_lea.vmem %s5, 64
    %v1281 = vld [vmem:[%s1280] sm:$0xff]
    %v1282 = vld [vmem:[%s1280 + $0x8] sm:$0xff]
    %v1283 = vld [vmem:[%s1280 + $0x10] sm:$0xff]
    %v1284 = vld [vmem:[%s1280 + $0x18] sm:$0xff]
    %v1285 = vld [vmem:[%s1280 + $0x20] sm:$0xff]
    %v1286 = vld [vmem:[%s1280 + $0x28] sm:$0xff]
    %v1287 = vld [vmem:[%s1280 + $0x30] sm:$0xff]
    %v1288 = vld [vmem:[%s1280 + $0x38] sm:$0xff]
    %v1290 = vsel %vm743, %v1279, 0
    %1292 = vmatprep.subr.mxu0 0.0
    %1293 = vmatpush1.msra.mxu0 0.0
    %1294 = vmatprep.subr.mxu0 0.0
    %1295 = vmatpush1.msra.mxu0 0.0
    %1296 = vmatprep.subr.mxu0 0.0
    %1297 = vmatpush1.msra.mxu0 0.0
    %1298 = vmatprep.subr.mxu0 0.0
    %1299 = vmatpush1.msra.mxu0 0.0
    %1300 = vmatprep.subr.mxu0 0.0
    %1301 = vmatpush1.msra.mxu0 0.0
    %1302 = vmatprep.subr.mxu0 0.0
    %1303 = vmatpush1.msra.mxu0 0.0
    %1304 = vmatprep.subr.mxu0 0.0
    %1305 = vmatpush1.msra.mxu0 0.0
    %1306 = vmatprep.subr.mxu0 0.0
    %1307 = vmatpush1.msra.mxu0 0.0
    %1308 = vmatprep.subr.mxu0 0.0
    %1309 = vmatpush1.msra.mxu0 %v1288
    %1310 = vmatprep.subr.mxu0 0.0
    %1311 = vmatpush1.msra.mxu0 %v1287
    %1312 = vmatprep.subr.mxu0 0.0
    %1313 = vmatpush1.msra.mxu0 %v1286
    %1314 = vmatprep.subr.mxu0 0.0
    %1315 = vmatpush1.msra.mxu0 %v1285
    %1316 = vmatprep.subr.mxu0 0.0
    %1317 = vmatpush1.msra.mxu0 %v1284
    %1318 = vmatprep.subr.mxu0 0.0
    %1319 = vmatpush1.msra.mxu0 %v1283
    %1320 = vmatprep.subr.mxu0 0.0
    %1321 = vmatpush1.msra.mxu0 %v1282
    %1322 = vmatprep.subr.mxu0 0.0
    %1323 = vmatpush1.msra.mxu0 %v1281
    %1324 = vmatprep.subr.mxu0 0.0
    %1325 = vmatpush2.msra.mxu0 0.0
    %1326 = vmatprep.subr.mxu0 0.0
    %1327 = vmatpush2.msra.mxu0 0.0
    %1328 = vmatprep.subr.mxu0 0.0
    %1329 = vmatpush2.msra.mxu0 0.0
    %1330 = vmatprep.subr.mxu0 0.0
    %1331 = vmatpush2.msra.mxu0 0.0
    %1332 = vmatprep.subr.mxu0 0.0
    %1333 = vmatpush2.msra.mxu0 0.0
    %1334 = vmatprep.subr.mxu0 0.0
    %1335 = vmatpush2.msra.mxu0 0.0
    %1336 = vmatprep.subr.mxu0 0.0
    %1337 = vmatpush2.msra.mxu0 0.0
    %1338 = vmatprep.subr.mxu0 0.0
    %1339 = vmatpush2.msra.mxu0 0.0
    %1340 = vmatprep.subr.mxu0 0.0
    %1341 = vmatpush2.msra.mxu0 0.0
    %1342 = vmatprep.subr.mxu0 0.0
    %1343 = vmatpush2.msra.mxu0 0.0
    %1344 = vmatprep.subr.mxu0 0.0
    %1345 = vmatpush2.msra.mxu0 0.0
    %1346 = vmatprep.subr.mxu0 0.0
    %1347 = vmatpush2.msra.mxu0 0.0
    %1348 = vmatprep.subr.mxu0 0.0
    %1349 = vmatpush2.msra.mxu0 0.0
    %1350 = vmatprep.subr.mxu0 0.0
    %1351 = vmatpush2.msra.mxu0 0.0
    %1352 = vmatprep.subr.mxu0 0.0
    %1353 = vmatpush2.msra.mxu0 0.0
    %1354 = vmatprep.subr.mxu0 0.0
    %1355 = vmatpush2.msra.mxu0 0.0
    %1356 = vmatprep.mubr.f32.mxu0 0.0
    %1357 = vmatmul.mubr.f32.gmra.mxu0 %v1290
    %v1358 = vpop.f32.mrf.mxu0
    %v1359 = vadd.f32 0.0, %v1358
    %v1360 = vpop.f32.mrf.mxu0
    %1361 = vdwg.mxu0
    %v1363 = vsel %vm743, %v1263, 0
    %1365 = vmatprep.subr.mxu0 0.0
    %1366 = vmatpush1.msra.mxu0 0.0
    %1367 = vmatprep.subr.mxu0 0.0
    %1368 = vmatpush1.msra.mxu0 0.0
    %1369 = vmatprep.subr.mxu0 0.0
    %1370 = vmatpush1.msra.mxu0 0.0
    %1371 = vmatprep.subr.mxu0 0.0
    %1372 = vmatpush1.msra.mxu0 0.0
    %1373 = vmatprep.subr.mxu0 0.0
    %1374 = vmatpush1.msra.mxu0 0.0
    %1375 = vmatprep.subr.mxu0 0.0
    %1376 = vmatpush1.msra.mxu0 0.0
    %1377 = vmatprep.subr.mxu0 0.0
    %1378 = vmatpush1.msra.mxu0 0.0
    %1379 = vmatprep.subr.mxu0 0.0
    %1380 = vmatpush1.msra.mxu0 0.0
    %1381 = vmatprep.subr.mxu0 0.0
    %1382 = vmatpush1.msra.mxu0 %v1271
    %1383 = vmatprep.subr.mxu0 0.0
    %1384 = vmatpush1.msra.mxu0 %v1270
    %1385 = vmatprep.subr.mxu0 0.0
    %1386 = vmatpush1.msra.mxu0 %v1269
    %1387 = vmatprep.subr.mxu0 0.0
    %1388 = vmatpush1.msra.mxu0 %v1268
    %1389 = vmatprep.subr.mxu0 0.0
    %1390 = vmatpush1.msra.mxu0 %v1267
    %1391 = vmatprep.subr.mxu0 0.0
    %1392 = vmatpush1.msra.mxu0 %v1266
    %1393 = vmatprep.subr.mxu0 0.0
    %1394 = vmatpush1.msra.mxu0 %v1265
    %1395 = vmatprep.subr.mxu0 0.0
    %1396 = vmatpush1.msra.mxu0 %v1264
    %1397 = vmatprep.subr.mxu0 0.0
    %1398 = vmatpush2.msra.mxu0 0.0
    %1399 = vmatprep.subr.mxu0 0.0
    %1400 = vmatpush2.msra.mxu0 0.0
    %1401 = vmatprep.subr.mxu0 0.0
    %1402 = vmatpush2.msra.mxu0 0.0
    %1403 = vmatprep.subr.mxu0 0.0
    %1404 = vmatpush2.msra.mxu0 0.0
    %1405 = vmatprep.subr.mxu0 0.0
    %1406 = vmatpush2.msra.mxu0 0.0
    %1407 = vmatprep.subr.mxu0 0.0
    %1408 = vmatpush2.msra.mxu0 0.0
    %1409 = vmatprep.subr.mxu0 0.0
    %1410 = vmatpush2.msra.mxu0 0.0
    %1411 = vmatprep.subr.mxu0 0.0
    %1412 = vmatpush2.msra.mxu0 0.0
    %1413 = vmatprep.subr.mxu0 0.0
    %1414 = vmatpush2.msra.mxu0 0.0
    %1415 = vmatprep.subr.mxu0 0.0
    %1416 = vmatpush2.msra.mxu0 0.0
    %1417 = vmatprep.subr.mxu0 0.0
    %1418 = vmatpush2.msra.mxu0 0.0
    %1419 = vmatprep.subr.mxu0 0.0
    %1420 = vmatpush2.msra.mxu0 0.0
    %1421 = vmatprep.subr.mxu0 0.0
    %1422 = vmatpush2.msra.mxu0 0.0
    %1423 = vmatprep.subr.mxu0 0.0
    %1424 = vmatpush2.msra.mxu0 0.0
    %1425 = vmatprep.subr.mxu0 0.0
    %1426 = vmatpush2.msra.mxu0 0.0
    %1427 = vmatprep.subr.mxu0 0.0
    %1428 = vmatpush2.msra.mxu0 0.0
    %1429 = vmatprep.mubr.f32.mxu0 0.0
    %1430 = vmatmul.mubr.f32.gmra.mxu0 %v1363
    %v1431 = vpop.f32.mrf.mxu0
    %v1432 = vadd.f32 %v1359, %v1431
    %v1433 = vpop.f32.mrf.mxu0
    %1434 = vdwg.mxu0
    %v1435 = vld [vmem:[#allocation4 + $0x20] sm:$0xff]
    %v1436 = vld [vmem:[#allocation4 + $0x28] sm:$0xff]
    %v1437 = vmax.f32 %v1435, %v1436
    %1439 = vrot.lane.b32.xlu0 %v1437, 64
    %v1440 = vpop.permute.xlu0 %1439
    %v1442 = vmax.f32 %v1437, %v1440
    %s1443 = scalar_lea.vmem %s5, 128
    %v1444 = vld [vmem:[%s1443] sm:$0xff]
    %v1445 = vld [vmem:[%s1443 + $0x8] sm:$0xff]
    %v1446 = vld [vmem:[%s1443 + $0x10] sm:$0xff]
    %v1447 = vld [vmem:[%s1443 + $0x18] sm:$0xff]
    %v1448 = vld [vmem:[%s1443 + $0x20] sm:$0xff]
    %v1449 = vld [vmem:[%s1443 + $0x28] sm:$0xff]
    %v1450 = vld [vmem:[%s1443 + $0x30] sm:$0xff]
    %v1451 = vld [vmem:[%s1443 + $0x38] sm:$0xff]
    %v1453 = vsel %vm743, %v1442, 0
    %1455 = vmatprep.subr.mxu0 0.0
    %1456 = vmatpush1.msra.mxu0 0.0
    %1457 = vmatprep.subr.mxu0 0.0
    %1458 = vmatpush1.msra.mxu0 0.0
    %1459 = vmatprep.subr.mxu0 0.0
    %1460 = vmatpush1.msra.mxu0 0.0
    %1461 = vmatprep.subr.mxu0 0.0
    %1462 = vmatpush1.msra.mxu0 0.0
    %1463 = vmatprep.subr.mxu0 0.0
    %1464 = vmatpush1.msra.mxu0 0.0
    %1465 = vmatprep.subr.mxu0 0.0
    %1466 = vmatpush1.msra.mxu0 0.0
    %1467 = vmatprep.subr.mxu0 0.0
    %1468 = vmatpush1.msra.mxu0 0.0
    %1469 = vmatprep.subr.mxu0 0.0
    %1470 = vmatpush1.msra.mxu0 0.0
    %1471 = vmatprep.subr.mxu0 0.0
    %1472 = vmatpush1.msra.mxu0 %v1451
    %1473 = vmatprep.subr.mxu0 0.0
    %1474 = vmatpush1.msra.mxu0 %v1450
    %1475 = vmatprep.subr.mxu0 0.0
    %1476 = vmatpush1.msra.mxu0 %v1449
    %1477 = vmatprep.subr.mxu0 0.0
    %1478 = vmatpush1.msra.mxu0 %v1448
    %1479 = vmatprep.subr.mxu0 0.0
    %1480 = vmatpush1.msra.mxu0 %v1447
    %1481 = vmatprep.subr.mxu0 0.0
    %1482 = vmatpush1.msra.mxu0 %v1446
    %1483 = vmatprep.subr.mxu0 0.0
    %1484 = vmatpush1.msra.mxu0 %v1445
    %1485 = vmatprep.subr.mxu0 0.0
    %1486 = vmatpush1.msra.mxu0 %v1444
    %1487 = vmatprep.subr.mxu0 0.0
    %1488 = vmatpush2.msra.mxu0 0.0
    %1489 = vmatprep.subr.mxu0 0.0
    %1490 = vmatpush2.msra.mxu0 0.0
    %1491 = vmatprep.subr.mxu0 0.0
    %1492 = vmatpush2.msra.mxu0 0.0
    %1493 = vmatprep.subr.mxu0 0.0
    %1494 = vmatpush2.msra.mxu0 0.0
    %1495 = vmatprep.subr.mxu0 0.0
    %1496 = vmatpush2.msra.mxu0 0.0
    %1497 = vmatprep.subr.mxu0 0.0
    %1498 = vmatpush2.msra.mxu0 0.0
    %1499 = vmatprep.subr.mxu0 0.0
    %1500 = vmatpush2.msra.mxu0 0.0
    %1501 = vmatprep.subr.mxu0 0.0
    %1502 = vmatpush2.msra.mxu0 0.0
    %1503 = vmatprep.subr.mxu0 0.0
    %1504 = vmatpush2.msra.mxu0 0.0
    %1505 = vmatprep.subr.mxu0 0.0
    %1506 = vmatpush2.msra.mxu0 0.0
    %1507 = vmatprep.subr.mxu0 0.0
    %1508 = vmatpush2.msra.mxu0 0.0
    %1509 = vmatprep.subr.mxu0 0.0
    %1510 = vmatpush2.msra.mxu0 0.0
    %1511 = vmatprep.subr.mxu0 0.0
    %1512 = vmatpush2.msra.mxu0 0.0
    %1513 = vmatprep.subr.mxu0 0.0
    %1514 = vmatpush2.msra.mxu0 0.0
    %1515 = vmatprep.subr.mxu0 0.0
    %1516 = vmatpush2.msra.mxu0 0.0
    %1517 = vmatprep.subr.mxu0 0.0
    %1518 = vmatpush2.msra.mxu0 0.0
    %1519 = vmatprep.mubr.f32.mxu0 0.0
    %1520 = vmatmul.mubr.f32.gmra.mxu0 %v1453
    %v1521 = vpop.f32.mrf.mxu0
    %v1522 = vadd.f32 0.0, %v1521
    %v1523 = vpop.f32.mrf.mxu0
    %1524 = vdwg.mxu0
    %v1525 = vadd.f32 %v1432, %v1522
    %v1526 = vld [vmem:[#allocation4 + $0x30] sm:$0xff]
    %v1527 = vld [vmem:[#allocation4 + $0x38] sm:$0xff]
    %v1528 = vmax.f32 %v1526, %v1527
    %1530 = vrot.lane.b32.xlu0 %v1528, 64
    %v1531 = vpop.permute.xlu0 %1530
    %v1533 = vmax.f32 %v1528, %v1531
    %s1534 = scalar_lea.vmem %s5, 192
    %v1535 = vld [vmem:[%s1534] sm:$0xff]
    %v1536 = vld [vmem:[%s1534 + $0x8] sm:$0xff]
    %v1537 = vld [vmem:[%s1534 + $0x10] sm:$0xff]
    %v1538 = vld [vmem:[%s1534 + $0x18] sm:$0xff]
    %v1539 = vld [vmem:[%s1534 + $0x20] sm:$0xff]
    %v1540 = vld [vmem:[%s1534 + $0x28] sm:$0xff]
    %v1541 = vld [vmem:[%s1534 + $0x30] sm:$0xff]
    %v1542 = vld [vmem:[%s1534 + $0x38] sm:$0xff]
    %v1544 = vsel %vm743, %v1533, 0
    %1546 = vmatprep.subr.mxu0 0.0
    %1547 = vmatpush1.msra.mxu0 0.0
    %1548 = vmatprep.subr.mxu0 0.0
    %1549 = vmatpush1.msra.mxu0 0.0
    %1550 = vmatprep.subr.mxu0 0.0
    %1551 = vmatpush1.msra.mxu0 0.0
    %1552 = vmatprep.subr.mxu0 0.0
    %1553 = vmatpush1.msra.mxu0 0.0
    %1554 = vmatprep.subr.mxu0 0.0
    %1555 = vmatpush1.msra.mxu0 0.0
    %1556 = vmatprep.subr.mxu0 0.0
    %1557 = vmatpush1.msra.mxu0 0.0
    %1558 = vmatprep.subr.mxu0 0.0
    %1559 = vmatpush1.msra.mxu0 0.0
    %1560 = vmatprep.subr.mxu0 0.0
    %1561 = vmatpush1.msra.mxu0 0.0
    %1562 = vmatprep.subr.mxu0 0.0
    %1563 = vmatpush1.msra.mxu0 %v1542
    %1564 = vmatprep.subr.mxu0 0.0
    %1565 = vmatpush1.msra.mxu0 %v1541
    %1566 = vmatprep.subr.mxu0 0.0
    %1567 = vmatpush1.msra.mxu0 %v1540
    %1568 = vmatprep.subr.mxu0 0.0
    %1569 = vmatpush1.msra.mxu0 %v1539
    %1570 = vmatprep.subr.mxu0 0.0
    %1571 = vmatpush1.msra.mxu0 %v1538
    %1572 = vmatprep.subr.mxu0 0.0
    %1573 = vmatpush1.msra.mxu0 %v1537
    %1574 = vmatprep.subr.mxu0 0.0
    %1575 = vmatpush1.msra.mxu0 %v1536
    %1576 = vmatprep.subr.mxu0 0.0
    %1577 = vmatpush1.msra.mxu0 %v1535
    %1578 = vmatprep.subr.mxu0 0.0
    %1579 = vmatpush2.msra.mxu0 0.0
    %1580 = vmatprep.subr.mxu0 0.0
    %1581 = vmatpush2.msra.mxu0 0.0
    %1582 = vmatprep.subr.mxu0 0.0
    %1583 = vmatpush2.msra.mxu0 0.0
    %1584 = vmatprep.subr.mxu0 0.0
    %1585 = vmatpush2.msra.mxu0 0.0
    %1586 = vmatprep.subr.mxu0 0.0
    %1587 = vmatpush2.msra.mxu0 0.0
    %1588 = vmatprep.subr.mxu0 0.0
    %1589 = vmatpush2.msra.mxu0 0.0
    %1590 = vmatprep.subr.mxu0 0.0
    %1591 = vmatpush2.msra.mxu0 0.0
    %1592 = vmatprep.subr.mxu0 0.0
    %1593 = vmatpush2.msra.mxu0 0.0
    %1594 = vmatprep.subr.mxu0 0.0
    %1595 = vmatpush2.msra.mxu0 0.0
    %1596 = vmatprep.subr.mxu0 0.0
    %1597 = vmatpush2.msra.mxu0 0.0
    %1598 = vmatprep.subr.mxu0 0.0
    %1599 = vmatpush2.msra.mxu0 0.0
    %1600 = vmatprep.subr.mxu0 0.0
    %1601 = vmatpush2.msra.mxu0 0.0
    %1602 = vmatprep.subr.mxu0 0.0
    %1603 = vmatpush2.msra.mxu0 0.0
    %1604 = vmatprep.subr.mxu0 0.0
    %1605 = vmatpush2.msra.mxu0 0.0
    %1606 = vmatprep.subr.mxu0 0.0
    %1607 = vmatpush2.msra.mxu0 0.0
    %1608 = vmatprep.subr.mxu0 0.0
    %1609 = vmatpush2.msra.mxu0 0.0
    %1610 = vmatprep.mubr.f32.mxu0 0.0
    %1611 = vmatmul.mubr.f32.gmra.mxu0 %v1544
    %v1612 = vpop.f32.mrf.mxu0
    %v1613 = vadd.f32 0.0, %v1612
    %v1614 = vpop.f32.mrf.mxu0
    %1615 = vdwg.mxu0
    %v1616 = vadd.f32 %v1525, %v1613
    %v1617 = vld [vmem:[%s6] sm:$0x1]
    %v1619 = vlaneseq
    %v1620 = vshrl.u32 %v1619, 7
    %v1621 = vsub.s32 0, %v1620
    %v1622 = vrot.slane %v1617, %v1621
    %v1624 = vadd.f32 %v1616, %v1622
    %v1625 = vmax.f32 %v1624, 0.0
    %v1626 = vld [vmem:[#allocation7] sm:$0xff]
    %v1627 = vld [vmem:[#allocation7 + $0x8] sm:$0xff]
    %v1628 = vld [vmem:[#allocation7 + $0x10] sm:$0xff]
    %v1629 = vld [vmem:[#allocation7 + $0x18] sm:$0xff]
    %v1630 = vld [vmem:[%s8] sm:$0x1]
    %v1632 = vlaneseq
    %v1633 = vshrl.u32 %v1632, 7
    %v1634 = vsub.s32 0, %v1633
    %v1635 = vrot.slane %v1630, %v1634
    %vm1637 = vcmask 261120
    %v1639 = vsel %vm1637, %v1625, 0
    %1641 = vmatprep.subr.mxu0 0.0
    %1642 = vmatpush1.msra.mxu0 0.0
    %1643 = vmatprep.subr.mxu0 0.0
    %1644 = vmatpush1.msra.mxu0 0.0
    %1645 = vmatprep.subr.mxu0 0.0
    %1646 = vmatpush1.msra.mxu0 0.0
    %1647 = vmatprep.subr.mxu0 0.0
    %1648 = vmatpush1.msra.mxu0 0.0
    %1649 = vmatprep.subr.mxu0 0.0
    %1650 = vmatpush1.msra.mxu0 0.0
    %1651 = vmatprep.subr.mxu0 0.0
    %1652 = vmatpush1.msra.mxu0 0.0
    %1653 = vmatprep.subr.mxu0 0.0
    %1654 = vmatpush1.msra.mxu0 0.0
    %1655 = vmatprep.subr.mxu0 0.0
    %1656 = vmatpush1.msra.mxu0 0.0
    %1657 = vmatprep.subr.mxu0 0.0
    %1658 = vmatpush1.msra.mxu0 0.0
    %1659 = vmatprep.subr.mxu0 0.0
    %1660 = vmatpush1.msra.mxu0 0.0
    %1661 = vmatprep.subr.mxu0 0.0
    %1662 = vmatpush1.msra.mxu0 0.0
    %1663 = vmatprep.subr.mxu0 0.0
    %1664 = vmatpush1.msra.mxu0 0.0
    %1665 = vmatprep.subr.mxu0 0.0
    %1666 = vmatpush1.msra.mxu0 %v1629
    %1667 = vmatprep.subr.mxu0 0.0
    %1668 = vmatpush1.msra.mxu0 %v1628
    %1669 = vmatprep.subr.mxu0 0.0
    %1670 = vmatpush1.msra.mxu0 %v1627
    %1671 = vmatprep.subr.mxu0 0.0
    %1672 = vmatpush1.msra.mxu0 %v1626
    %1673 = vmatprep.subr.mxu0 0.0
    %1674 = vmatpush2.msra.mxu0 0.0
    %1675 = vmatprep.subr.mxu0 0.0
    %1676 = vmatpush2.msra.mxu0 0.0
    %1677 = vmatprep.subr.mxu0 0.0
    %1678 = vmatpush2.msra.mxu0 0.0
    %1679 = vmatprep.subr.mxu0 0.0
    %1680 = vmatpush2.msra.mxu0 0.0
    %1681 = vmatprep.subr.mxu0 0.0
    %1682 = vmatpush2.msra.mxu0 0.0
    %1683 = vmatprep.subr.mxu0 0.0
    %1684 = vmatpush2.msra.mxu0 0.0
    %1685 = vmatprep.subr.mxu0 0.0
    %1686 = vmatpush2.msra.mxu0 0.0
    %1687 = vmatprep.subr.mxu0 0.0
    %1688 = vmatpush2.msra.mxu0 0.0
    %1689 = vmatprep.subr.mxu0 0.0
    %1690 = vmatpush2.msra.mxu0 0.0
    %1691 = vmatprep.subr.mxu0 0.0
    %1692 = vmatpush2.msra.mxu0 0.0
    %1693 = vmatprep.subr.mxu0 0.0
    %1694 = vmatpush2.msra.mxu0 0.0
    %1695 = vmatprep.subr.mxu0 0.0
    %1696 = vmatpush2.msra.mxu0 0.0
    %1697 = vmatprep.subr.mxu0 0.0
    %1698 = vmatpush2.msra.mxu0 0.0
    %1699 = vmatprep.subr.mxu0 0.0
    %1700 = vmatpush2.msra.mxu0 0.0
    %1701 = vmatprep.subr.mxu0 0.0
    %1702 = vmatpush2.msra.mxu0 0.0
    %1703 = vmatprep.subr.mxu0 0.0
    %1704 = vmatpush2.msra.mxu0 0.0
    %1705 = vmatprep.mubr.f32.mxu0 0.0
    %1706 = vmatmul.mubr.f32.gmra.mxu0 %v1639
    %v1707 = vpop.f32.mrf.mxu0
    %v1708 = vadd.f32 %v1635, %v1707
    %v1709 = vpop.f32.mrf.mxu0
    %1710 = vdwg.mxu0
    %1711 = vst [vmem:[%s9] sm:$0xff] %v1708
    // Predicated region
    $region50: #{svhn_forward.1} parent=1 // pred_check
      _
    $region51: #{svhn_forward.1} parent=1 // pred_check_branch
      %1713 = sbr.rel (0) target = $region53
    $region52: #{svhn_forward.1} parent=1 // pred_region
      _
    $region53: #{svhn_forward.1} parent=1 // pred_fallthru
      _
    // Predicated region
    $region54: #{svhn_forward.1} parent=1 // pred_check
      _
    $region55: #{svhn_forward.1} parent=1 // pred_check_branch
      %1715 = sbr.rel (0) target = $region57
    $region56: #{svhn_forward.1} parent=1 // pred_region
      _
    $region57: #{svhn_forward.1} parent=1 // pred_fallthru
      _
    %1716 = vsyncpa [#allocation6], 1
    %1717 = vsyncpa [#allocation8], 1

</llo_original>
